<compile_context>
chip_gen: v5e
topology: v5e:2x2
jax: 0.10.0
libtpu: 0.0.40
codegen_flags: <defaults>
</compile_context>

<pallas_src>
import jax
import jax.numpy as jnp
from jax.experimental import pallas as pl
from jax.experimental.pallas import tpu as pltpu


def _round_up(n, m):
    return ((n + m - 1) // m) * m


def bpff_kernel(counts_ref, wb_ref, wf_ref,
                x_ref, bsel_ref, w1_ref, b1_ref, w2_ref, b2_ref,
                gamma_ref, beta_ref, o_ref, y_acc):
    """grid = (token_tile t, behavior b, d_ff chunk f).

    The output block stays resident across (b, f); y_acc accumulates the
    partial FFN over d_ff chunks for the current (t, b).
    """
    t = pl.program_id(0)
    b = pl.program_id(1)
    f = pl.program_id(2)
    n_b = pl.num_programs(1)
    nf = pl.num_programs(2)

    # Zero the resident output tile once per token tile.  Also produces exact
    # zeros for padding tokens (b_seq == 0), which no behavior ever selects.
    @pl.when(jnp.logical_and(b == 0, f == 0))
    def _():
        o_ref[...] = jnp.zeros_like(o_ref)

    # Tokens are pre-sorted by behavior id, so most (tile, behavior) pairs are
    # empty: skip all MXU / VPU work (and their weight reads) for them.
    has_tokens = counts_ref[t * n_b + b] > 0

    @pl.when(jnp.logical_and(has_tokens, f == 0))
    def _():
        y_acc[...] = jnp.zeros_like(y_acc)

    @pl.when(has_tokens)
    def _():
        xc = x_ref[...].astype(w1_ref.dtype)            # MXU dtype cast in-kernel
        h = jnp.maximum(
            jnp.dot(xc, w1_ref[0], preferred_element_type=jnp.float32)
            + b1_ref[0], 0.0)                           # (TN, FT) f32
        y_acc[...] += jnp.dot(h.astype(w2_ref.dtype), w2_ref[0],
                              preferred_element_type=jnp.float32)

    # After the last d_ff chunk: bias, f32 residual, LayerNorm, select-write.
    @pl.when(jnp.logical_and(has_tokens, f == nf - 1))
    def _():
        x32 = x_ref[...].astype(jnp.float32)            # x is streamed in f32
        z = y_acc[...] + b2_ref[0] + x32
        inv_d = 1.0 / z.shape[-1]
        mean = jnp.sum(z, axis=-1, keepdims=True) * inv_d
        var = jnp.sum(z * z, axis=-1, keepdims=True) * inv_d - mean * mean
        var = jnp.maximum(var, 0.0)
        ln = (z - mean) * jax.lax.rsqrt(var + 1e-5) * gamma_ref[0] + beta_ref[0]
        mask = bsel_ref[...] == (b + 1)                 # (TN, 1) bool
        o_ref[...] = jnp.where(mask, ln.astype(o_ref.dtype), o_ref[...])


def behavior_specific_pff(x, b_seq, params, *, compute_dtype=jnp.bfloat16,
                          tn_max=1024, ft_max=1024):
    """x: (B, T, d_model) f32, b_seq: (B, T) int (0 = padding).

    compute_dtype: dtype of the MXU matmul inputs (x-cast, W1, W2, h).
    Accumulation, residual and LayerNorm math are always float32.
    """
    assert tn_max % 8 == 0 and ft_max % 128 == 0
    W1, b1, W2, b2, gamma, beta = params
    B, T, d_model = x.shape
    n_b, _, d_ff = W1.shape
    N = B * T

    # ---- token tiling: TN multiple of 8; nt >= 2 whenever N > tn_max --------
    TN = min(tn_max, _round_up(N, 8))
    N_p = _round_up(N, TN)

    # ---- d_ff tiling: full d_ff, or 128-multiple chunks --------------------
    if d_ff <= ft_max:
        FT, d_ff_p = d_ff, d_ff
    else:
        FT = ft_max
        d_ff_p = _round_up(d_ff, FT)

    nt, nf = N_p // TN, d_ff_p // FT

    # ---- sort tokens by behavior id (grouped-matmul layout) -----------------
    xf = x.reshape(N, d_model).astype(jnp.float32)
    bflat = b_seq.reshape(N).astype(jnp.int32)
    sort_idx = jnp.argsort(bflat)
    xs = jnp.take(xf, sort_idx, axis=0)
    bs = jnp.take(bflat, sort_idx, axis=0)
    if N_p != N:
        xs = jnp.pad(xs, ((0, N_p - N), (0, 0)))
        bs = jnp.pad(bs, ((0, N_p - N),))        # pad id 0 -> zero rows
    bsel = bs.reshape(N_p, 1)

    # ---- scalar-prefetch tables ---------------------------------------------
    # counts[t, b]: number of tokens of behavior (b+1) in token tile t.
    tiles = bs.reshape(nt, TN)
    behavior_ids = jnp.arange(1, n_b + 1, dtype=jnp.int32)
    counts = jnp.sum(tiles[:, :, None] == behavior_ids[None, None, :],
                     axis=1).astype(jnp.int32)                       # (nt, n_b)
    counts_flat = counts.reshape(nt * n_b)

    # Carried-forward weight block indices: active steps get their true (b, f);
    # inactive steps repeat the previous step's indices so the weight DMA is
    # elided (Pallas skips the copy when the block index does not change).
    L2 = nt * n_b * nf
    steps = jnp.arange(L2, dtype=jnp.int32)
    b_of = (steps // nf) % n_b
    f_of = steps % nf
    active = jnp.repeat(counts_flat > 0, nf)
    pos = jnp.where(active, steps, -1)
    lastpos = jax.lax.cummax(pos, axis=0)
    safe = jnp.maximum(lastpos, 0)
    wsel_b = jnp.where(lastpos >= 0, b_of[safe], 0).astype(jnp.int32)
    wsel_f = jnp.where(lastpos >= 0, f_of[safe], 0).astype(jnp.int32)

    # ---- prepare weights (pad, reshape, cast) -------------------------------
    W1p, W2p, b1p = W1, W2, b1
    if d_ff_p != d_ff:  # zero neurons: relu(0 + 0) = 0, contributes nothing
        pad = d_ff_p - d_ff
        W1p = jnp.pad(W1, ((0, 0), (0, 0), (0, pad)))
        W2p = jnp.pad(W2, ((0, 0), (0, pad), (0, 0)))
        b1p = jnp.pad(b1, ((0, 0), (0, pad)))
    W1p = W1p.astype(compute_dtype)
    W2p = W2p.astype(compute_dtype)
    b1p = b1p.reshape(n_b, 1, d_ff_p).astype(jnp.float32)
    b2p = b2.reshape(n_b, 1, d_model).astype(jnp.float32)
    gammap = gamma.reshape(n_b, 1, d_model).astype(jnp.float32)
    betap = beta.reshape(n_b, 1, d_model).astype(jnp.float32)

    cbytes = jnp.dtype(compute_dtype).itemsize

    # ---- generation-aware VMEM budget ---------------------------------------
    try:
        vmem_cap = int(pltpu.get_tpu_info().vmem_capacity_bytes)
    except Exception:
        vmem_cap = 64 * 2 ** 20
    hard_cap = max(32 * 2 ** 20, (vmem_cap * 3) // 4)

    lane = lambda n: _round_up(max(n, 1), 128)
    sub = lambda n: _round_up(max(n, 1), 8)
    per_step = (
        sub(TN) * lane(d_model) * 4             # x tile (f32)
        + sub(TN) * 128 * 4                     # b_seq tile
        + sub(d_model) * lane(FT) * cbytes      # W1 chunk
        + sub(FT) * lane(d_model) * cbytes      # W2 chunk
        + 8 * lane(FT) * 4                      # b1 chunk
        + 3 * 8 * lane(d_model) * 4             # b2, gamma, beta
        + sub(TN) * lane(d_model) * 4           # output tile
    )
    scratch_bytes = sub(TN) * lane(d_model) * 4
    vmem_limit = int(min(hard_cap,
                         max(16 * 2 ** 20,
                             2 * per_step + scratch_bytes + 8 * 2 ** 20)))

    # ---- advisory cost estimate (grouped: ~1 behavior per token) ------------
    flops = 4 * N_p * d_model * d_ff_p
    bytes_accessed = (N_p * d_model * 4 * 2 + N_p * 4
                      + (nt + n_b) * 2 * d_model * d_ff_p * cbytes
                      + n_b * (d_ff_p + 3 * d_model) * 4)
    cost = pl.CostEstimate(flops=int(flops), transcendentals=int(N_p),
                           bytes_accessed=int(bytes_accessed))

    # ---- index maps (scalar-prefetch refs are trailing positional args) -----
    def _s(t, b, f):
        return (t * n_b + b) * nf + f

    def x_map(t, b, f, cnt, wb, wf):
        return (t, 0)

    def bsel_map(t, b, f, cnt, wb, wf):
        return (t, 0)

    def w1_map(t, b, f, cnt, wb, wf):
        s = _s(t, b, f)
        return (wb[s], 0, wf[s])

    def b1_map(t, b, f, cnt, wb, wf):
        s = _s(t, b, f)
        return (wb[s], 0, wf[s])

    def w2_map(t, b, f, cnt, wb, wf):
        s = _s(t, b, f)
        return (wb[s], wf[s], 0)

    def bvec_map(t, b, f, cnt, wb, wf):
        s = _s(t, b, f)
        return (wb[s], 0, 0)

    def out_map(t, b, f, cnt, wb, wf):
        return (t, 0)

    out = pl.pallas_call(
        bpff_kernel,
        out_shape=jax.ShapeDtypeStruct((N_p, d_model), jnp.float32),
        grid_spec=pltpu.PrefetchScalarGridSpec(
            num_scalar_prefetch=3,
            grid=(nt, n_b, nf),
            in_specs=[
                pl.BlockSpec((TN, d_model), x_map),        # x (f32)
                pl.BlockSpec((TN, 1), bsel_map),           # b_seq
                pl.BlockSpec((1, d_model, FT), w1_map),    # W1
                pl.BlockSpec((1, 1, FT), b1_map),          # b1
                pl.BlockSpec((1, FT, d_model), w2_map),    # W2
                pl.BlockSpec((1, 1, d_model), bvec_map),   # b2
                pl.BlockSpec((1, 1, d_model), bvec_map),   # gamma
                pl.BlockSpec((1, 1, d_model), bvec_map),   # beta
            ],
            out_specs=pl.BlockSpec((TN, d_model), out_map),
            scratch_shapes=[pltpu.VMEM((TN, d_model), jnp.float32)],
        ),
        compiler_params=pltpu.CompilerParams(
            dimension_semantics=("parallel", "arbitrary", "arbitrary"),
            vmem_limit_bytes=vmem_limit),
        cost_estimate=cost,
    )(counts_flat, wsel_b, wsel_f, xs, bsel, W1p, b1p, W2p, b2p, gammap, betap)

    # ---- unsort back to the original token order -----------------------------
    inv = jnp.argsort(sort_idx)
    out = jnp.take(out[:N], inv, axis=0)
    return out.reshape(B, T, d_model)


def reference_pff(x, b_seq, params):
    """Pure-JAX reference mirroring the PyTorch module (eval mode)."""
    W1, b1, W2, b2, gamma, beta = params
    n_b = W1.shape[0]
    hp = jax.lax.Precision.HIGHEST

    def single(i, xb):
        h = jnp.maximum(jnp.matmul(xb, W1[i], precision=hp) + b1[i], 0.0)
        y = jnp.matmul(h, W2[i], precision=hp) + b2[i]
        z = y + xb
        mean = jnp.mean(z, axis=-1, keepdims=True)
        var = jnp.mean((z - mean) ** 2, axis=-1, keepdims=True)
        return (z - mean) / jnp.sqrt(var + 1e-5) * gamma[i] + beta[i]

    outs = [jnp.zeros_like(x)] + [single(i, x) for i in range(n_b)]
    stacked = jnp.stack(outs, axis=0)                       # (n_b+1, B, T, H)
    onehot = jax.nn.one_hot(b_seq, n_b + 1, dtype=x.dtype)  # (B, T, n_b+1)
    return jnp.einsum('nBTh,BTn->BTh', stacked, onehot)


def init_params(key, n_b, d_model, d_ff):
    ks = jax.random.split(key, 4)
    W1 = jax.random.normal(ks[0], (n_b, d_model, d_ff), jnp.float32) * 0.05
    b1 = jax.random.normal(ks[1], (n_b, d_ff), jnp.float32) * 0.01
    W2 = jax.random.normal(ks[2], (n_b, d_ff, d_model), jnp.float32) * 0.05
    b2 = jax.random.normal(ks[3], (n_b, d_model), jnp.float32) * 0.01
    gamma = jnp.ones((n_b, d_model), jnp.float32)
    beta = jnp.zeros((n_b, d_model), jnp.float32)
    return (W1, b1, W2, b2, gamma, beta)


if __name__ == "__main__":
    # Lane-dense small shapes (d_model, d_ff multiples of 128).
    B, T, d_model, d_ff, n_b = 2, 16, 128, 256, 3

    key = jax.random.PRNGKey(0)
    kx, kb, kp = jax.random.split(key, 3)

    x = jax.random.normal(kx, (B, T, d_model), jnp.float32)
    # behavior ids in [0, n_b]; 0 means padding -> zero output for that token
    b_seq = jax.random.randint(kb, (B, T), 0, n_b + 1, dtype=jnp.int32)
    params = init_params(kp, n_b, d_model, d_ff)

    ref = reference_pff(x, b_seq, params)

    # 1) f32 MXU inputs, default tiles (single token / d_ff tile at this size).
    out_f32 = jax.block_until_ready(
        behavior_specific_pff(x, b_seq, params, compute_dtype=jnp.float32))
    assert jnp.allclose(out_f32, ref, rtol=3e-2, atol=3e-2), "f32 mismatch vs ref"

    # Padding tokens must be exactly zero (zero-init + never selected).
    assert bool(jnp.all(out_f32[b_seq == 0] == 0.0)), "padding rows not zero"

    # 2) Multi-tile path (token tiling, d_ff chunk accumulation, count-skip,
    #    carried weight indices) must agree tightly with the single-tile run.
    out_tiled = jax.block_until_ready(
        behavior_specific_pff(x, b_seq, params, compute_dtype=jnp.float32,
                              tn_max=16, ft_max=128))
    assert jnp.allclose(out_tiled, out_f32, rtol=1e-3, atol=1e-3), "tiled mismatch"

    # 3) Performance config: bf16 MXU inputs, f32 accumulation + LayerNorm.
    out_bf16 = jax.block_until_ready(
        behavior_specific_pff(x, b_seq, params, compute_dtype=jnp.bfloat16))
    assert jnp.allclose(out_bf16, ref, rtol=5e-2, atol=5e-2), "bf16 mismatch"

    print("KERNEL_OK")
</pallas_src>

<mosaic_0001>
module attributes {stable_mosaic.version = 11 : i64} {
  func.func @bpff_kernel(%arg0: i32, %arg1: i32, %arg2: i32, %arg3: memref<3xi32, #tpu.memory_space<smem>>, %arg4: memref<3xi32, #tpu.memory_space<smem>>, %arg5: memref<3xi32, #tpu.memory_space<smem>>, %arg6: memref<32x128xf32, #tpu.memory_space<vmem>>, %arg7: memref<32x1xi32, #tpu.memory_space<vmem>>, %arg8: memref<1x128x256xf32, #tpu.memory_space<vmem>>, %arg9: memref<1x1x256xf32, #tpu.memory_space<vmem>>, %arg10: memref<1x256x128xf32, #tpu.memory_space<vmem>>, %arg11: memref<1x1x128xf32, #tpu.memory_space<vmem>>, %arg12: memref<1x1x128xf32, #tpu.memory_space<vmem>>, %arg13: memref<1x1x128xf32, #tpu.memory_space<vmem>>, %arg14: memref<32x128xf32, #tpu.memory_space<vmem>>, %arg15: memref<32x128xf32, #tpu.memory_space<vmem>>) attributes {dimension_semantics = [#tpu.dimension_semantics<parallel>, #tpu.dimension_semantics<arbitrary>, #tpu.dimension_semantics<arbitrary>], iteration_bounds = array<i64: 1, 3, 1>, scalar_prefetch = 3 : i64, scratch_operands = 1 : i64, tpu.core_type = #tpu.core_type<tc>, window_params = [{transform_indices = @transform_0, window_bounds = array<i64: 32, 128>}, {transform_indices = @transform_1, window_bounds = array<i64: 32, 1>}, {transform_indices = @transform_2, window_bounds = array<i64: 1, 128, 256>}, {transform_indices = @transform_3, window_bounds = array<i64: 1, 1, 256>}, {transform_indices = @transform_4, window_bounds = array<i64: 1, 256, 128>}, {transform_indices = @transform_5, window_bounds = array<i64: 1, 1, 128>}, {transform_indices = @transform_6, window_bounds = array<i64: 1, 1, 128>}, {transform_indices = @transform_7, window_bounds = array<i64: 1, 1, 128>}, {transform_indices = @transform_8, window_bounds = array<i64: 32, 128>}]} {
    %c0_i32 = arith.constant 0 : i32
    %0 = arith.cmpi eq, %arg1, %c0_i32 : i32
    %c0_i32_0 = arith.constant 0 : i32
    %1 = arith.cmpi eq, %arg2, %c0_i32_0 : i32
    %2 = arith.andi %0, %1 : i1
    %3 = arith.extui %2 : i1 to i32
    %c0_i32_1 = arith.constant 0 : i32
    %4 = arith.cmpi ne, %3, %c0_i32_1 : i32
    scf.if %4 {
      %cst = arith.constant 0.000000e+00 : f32
      %20 = vector.broadcast %cst : f32 to vector<32x128xf32>
      %c0 = arith.constant 0 : index
      %c0_8 = arith.constant 0 : index
      %21 = vector.load %arg14[%c0, %c0_8] : memref<32x128xf32, #tpu.memory_space<vmem>>, vector<32x128xf32>
      tpu.vector_store %arg14[%c0, %c0_8], %20 {strides = array<i32>} : memref<32x128xf32, #tpu.memory_space<vmem>>, vector<32x128xf32>,
    } else {
    }
    %c3_i32 = arith.constant 3 : i32
    %5 = arith.muli %arg0, %c3_i32 : i32
    %6 = arith.addi %5, %arg1 : i32
    %7 = arith.index_cast %6 : i32 to index
    %8 = memref.load %arg3[%7] : memref<3xi32, #tpu.memory_space<smem>>
    %c0_i32_2 = arith.constant 0 : i32
    %9 = arith.cmpi sgt, %8, %c0_i32_2 : i32
    %c0_i32_3 = arith.constant 0 : i32
    %10 = arith.cmpi eq, %arg2, %c0_i32_3 : i32
    %11 = arith.andi %9, %10 : i1
    %12 = arith.extui %11 : i1 to i32
    %c0_i32_4 = arith.constant 0 : i32
    %13 = arith.cmpi ne, %12, %c0_i32_4 : i32
    scf.if %13 {
      %cst = arith.constant 0.000000e+00 : f32
      %20 = vector.broadcast %cst : f32 to vector<32x128xf32>
      %c0 = arith.constant 0 : index
      %c0_8 = arith.constant 0 : index
      %21 = vector.load %arg15[%c0, %c0_8] : memref<32x128xf32, #tpu.memory_space<vmem>>, vector<32x128xf32>
      tpu.vector_store %arg15[%c0, %c0_8], %20 {strides = array<i32>} : memref<32x128xf32, #tpu.memory_space<vmem>>, vector<32x128xf32>,
    } else {
    }
    %14 = arith.extui %9 : i1 to i32
    %c0_i32_5 = arith.constant 0 : i32
    %15 = arith.cmpi ne, %14, %c0_i32_5 : i32
    scf.if %15 {
      %c0 = arith.constant 0 : index
      %c0_8 = arith.constant 0 : index
      %20 = vector.load %arg6[%c0, %c0_8] : memref<32x128xf32, #tpu.memory_space<vmem>>, vector<32x128xf32>
      %c0_9 = arith.constant 0 : index
      %c0_10 = arith.constant 0 : index
      %c0_11 = arith.constant 0 : index
      %21 = vector.load %arg8[%c0_9, %c0_10, %c0_11] : memref<1x128x256xf32, #tpu.memory_space<vmem>>, vector<1x128x256xf32>
      %22 = vector.shape_cast %21 : vector<1x128x256xf32> to vector<128x256xf32>
      %cst = arith.constant dense<0.000000e+00> : vector<32x256xf32>
      %23 = tpu.matmul %20, %22, %cst {dimension_numbers = #tpu.dot_dimension_numbers<[1], [0], [0], [1], [0, 0, 1, 1], [], []>} : vector<32x128xf32>, vector<128x256xf32>, vector<32x256xf32> -> vector<32x256xf32>
      %c0_12 = arith.constant 0 : index
      %c0_13 = arith.constant 0 : index
      %c0_14 = arith.constant 0 : index
      %24 = vector.load %arg9[%c0_12, %c0_13, %c0_14] : memref<1x1x256xf32, #tpu.memory_space<vmem>>, vector<1x1x256xf32>
      %25 = vector.shape_cast %24 : vector<1x1x256xf32> to vector<1x256xf32>
      %26 = vector.broadcast %25 : vector<1x256xf32> to vector<32x256xf32>
      %27 = arith.addf %23, %26 : vector<32x256xf32>
      %cst_15 = arith.constant 0.000000e+00 : f32
      %28 = vector.broadcast %cst_15 : f32 to vector<32x256xf32>
      %29 = arith.maximumf %27, %28 : vector<32x256xf32>
      %c0_16 = arith.constant 0 : index
      %c0_17 = arith.constant 0 : index
      %30 = vector.load %arg15[%c0_16, %c0_17] : memref<32x128xf32, #tpu.memory_space<vmem>>, vector<32x128xf32>
      %c0_18 = arith.constant 0 : index
      %c0_19 = arith.constant 0 : index
      %c0_20 = arith.constant 0 : index
      %31 = vector.load %arg10[%c0_18, %c0_19, %c0_20] : memref<1x256x128xf32, #tpu.memory_space<vmem>>, vector<1x256x128xf32>
      %32 = vector.shape_cast %31 : vector<1x256x128xf32> to vector<256x128xf32>
      %cst_21 = arith.constant dense<0.000000e+00> : vector<32x128xf32>
      %33 = tpu.matmul %29, %32, %cst_21 {dimension_numbers = #tpu.dot_dimension_numbers<[1], [0], [0], [1], [0, 0, 1, 1], [], []>} : vector<32x256xf32>, vector<256x128xf32>, vector<32x128xf32> -> vector<32x128xf32>
      %34 = arith.addf %30, %33 : vector<32x128xf32>
      %c0_22 = arith.constant 0 : index
      %c0_23 = arith.constant 0 : index
      %35 = vector.load %arg15[%c0_22, %c0_23] : memref<32x128xf32, #tpu.memory_space<vmem>>, vector<32x128xf32>
      tpu.vector_store %arg15[%c0_22, %c0_23], %34 {strides = array<i32>} : memref<32x128xf32, #tpu.memory_space<vmem>>, vector<32x128xf32>,
    } else {
    }
    %c0_i32_6 = arith.constant 0 : i32
    %16 = arith.cmpi eq, %arg2, %c0_i32_6 : i32
    %17 = arith.andi %9, %16 : i1
    %18 = arith.extui %17 : i1 to i32
    %c0_i32_7 = arith.constant 0 : i32
    %19 = arith.cmpi ne, %18, %c0_i32_7 : i32
    scf.if %19 {
      %c0 = arith.constant 0 : index
      %c0_8 = arith.constant 0 : index
      %20 = vector.load %arg6[%c0, %c0_8] : memref<32x128xf32, #tpu.memory_space<vmem>>, vector<32x128xf32>
      %c0_9 = arith.constant 0 : index
      %c0_10 = arith.constant 0 : index
      %21 = vector.load %arg15[%c0_9, %c0_10] : memref<32x128xf32, #tpu.memory_space<vmem>>, vector<32x128xf32>
      %c0_11 = arith.constant 0 : index
      %c0_12 = arith.constant 0 : index
      %c0_13 = arith.constant 0 : index
      %22 = vector.load %arg11[%c0_11, %c0_12, %c0_13] : memref<1x1x128xf32, #tpu.memory_space<vmem>>, vector<1x1x128xf32>
      %23 = vector.shape_cast %22 : vector<1x1x128xf32> to vector<1x128xf32>
      %24 = vector.broadcast %23 : vector<1x128xf32> to vector<32x128xf32>
      %25 = arith.addf %21, %24 : vector<32x128xf32>
      %26 = arith.addf %25, %20 : vector<32x128xf32>
      %cst = arith.constant dense<0.000000e+00> : vector<32xf32>
      %27 = vector.multi_reduction <add>, %26, %cst [1] : vector<32x128xf32> to vector<32xf32>
      %28 = vector.shape_cast %27 : vector<32xf32> to vector<32x1xf32>
      %cst_14 = arith.constant 7.812500e-03 : f32
      %29 = vector.broadcast %cst_14 : f32 to vector<32x1xf32>
      %30 = arith.mulf %28, %29 : vector<32x1xf32>
      %31 = arith.mulf %26, %26 : vector<32x128xf32>
      %cst_15 = arith.constant dense<0.000000e+00> : vector<32xf32>
      %32 = vector.multi_reduction <add>, %31, %cst_15 [1] : vector<32x128xf32> to vector<32xf32>
      %33 = vector.shape_cast %32 : vector<32xf32> to vector<32x1xf32>
      %cst_16 = arith.constant 7.812500e-03 : f32
      %34 = vector.broadcast %cst_16 : f32 to vector<32x1xf32>
      %35 = arith.mulf %33, %34 : vector<32x1xf32>
      %36 = arith.mulf %30, %30 : vector<32x1xf32>
      %37 = arith.subf %35, %36 : vector<32x1xf32>
      %cst_17 = arith.constant 0.000000e+00 : f32
      %38 = vector.broadcast %cst_17 : f32 to vector<32x1xf32>
      %39 = arith.maximumf %37, %38 : vector<32x1xf32>
      %40 = vector.broadcast %30 : vector<32x1xf32> to vector<32x128xf32>
      %41 = arith.subf %26, %40 : vector<32x128xf32>
      %cst_18 = arith.constant 9.99999974E-6 : f32
      %42 = vector.broadcast %cst_18 : f32 to vector<32x1xf32>
      %43 = arith.addf %39, %42 : vector<32x1xf32>
      %44 = math.rsqrt %43 : vector<32x1xf32>
      %45 = vector.broadcast %44 : vector<32x1xf32> to vector<32x128xf32>
      %46 = arith.mulf %41, %45 : vector<32x128xf32>
      %c0_19 = arith.constant 0 : index
      %c0_20 = arith.constant 0 : index
      %c0_21 = arith.constant 0 : index
      %47 = vector.load %arg12[%c0_19, %c0_20, %c0_21] : memref<1x1x128xf32, #tpu.memory_space<vmem>>, vector<1x1x128xf32>
      %48 = vector.shape_cast %47 : vector<1x1x128xf32> to vector<1x128xf32>
      %49 = vector.broadcast %48 : vector<1x128xf32> to vector<32x128xf32>
      %50 = arith.mulf %46, %49 : vector<32x128xf32>
      %c0_22 = arith.constant 0 : index
      %c0_23 = arith.constant 0 : index
      %c0_24 = arith.constant 0 : index
      %51 = vector.load %arg13[%c0_22, %c0_23, %c0_24] : memref<1x1x128xf32, #tpu.memory_space<vmem>>, vector<1x1x128xf32>
      %52 = vector.shape_cast %51 : vector<1x1x128xf32> to vector<1x128xf32>
      %53 = vector.broadcast %52 : vector<1x128xf32> to vector<32x128xf32>
      %54 = arith.addf %50, %53 : vector<32x128xf32>
      %c0_25 = arith.constant 0 : index
      %c0_26 = arith.constant 0 : index
      %55 = vector.load %arg7[%c0_25, %c0_26] : memref<32x1xi32, #tpu.memory_space<vmem>>, vector<32x1xi32>
      %c1_i32 = arith.constant 1 : i32
      %56 = arith.addi %arg1, %c1_i32 : i32
      %57 = vector.broadcast %56 : i32 to vector<32x1xi32>
      %58 = arith.cmpi eq, %55, %57 : vector<32x1xi32>
      %c0_27 = arith.constant 0 : index
      %c0_28 = arith.constant 0 : index
      %59 = vector.load %arg14[%c0_27, %c0_28] : memref<32x128xf32, #tpu.memory_space<vmem>>, vector<32x128xf32>
      %60 = vector.shape_cast %58 : vector<32x1xi1> to vector<32x1xi1>
      %61 = vector.broadcast %60 : vector<32x1xi1> to vector<32x128xi1>
      %62 = arith.select %61, %54, %59 : vector<32x128xi1>, vector<32x128xf32>
      %c0_29 = arith.constant 0 : index
      %c0_30 = arith.constant 0 : index
      %63 = vector.load %arg14[%c0_29, %c0_30] : memref<32x128xf32, #tpu.memory_space<vmem>>, vector<32x128xf32>
      tpu.vector_store %arg14[%c0_29, %c0_30], %62 {strides = array<i32>} : memref<32x128xf32, #tpu.memory_space<vmem>>, vector<32x128xf32>,
    } else {
    }
    return
  }
  func.func @transform_0(%arg0: i32, %arg1: i32, %arg2: i32, %arg3: memref<3xi32, #tpu.memory_space<smem>>, %arg4: memref<3xi32, #tpu.memory_space<smem>>, %arg5: memref<3xi32, #tpu.memory_space<smem>>) -> (i32, i32) {
    %c0_i32 = arith.constant 0 : i32
    %c0_i32_0 = arith.constant 0 : i32
    return %arg0, %c0_i32 : i32, i32
  }
  func.func @transform_1(%arg0: i32, %arg1: i32, %arg2: i32, %arg3: memref<3xi32, #tpu.memory_space<smem>>, %arg4: memref<3xi32, #tpu.memory_space<smem>>, %arg5: memref<3xi32, #tpu.memory_space<smem>>) -> (i32, i32) {
    %c0_i32 = arith.constant 0 : i32
    %c0_i32_0 = arith.constant 0 : i32
    return %arg0, %c0_i32 : i32, i32
  }
  func.func @transform_2(%arg0: i32, %arg1: i32, %arg2: i32, %arg3: memref<3xi32, #tpu.memory_space<smem>>, %arg4: memref<3xi32, #tpu.memory_space<smem>>, %arg5: memref<3xi32, #tpu.memory_space<smem>>) -> (i32, i32, i32) {
    %c3_i32 = arith.constant 3 : i32
    %0 = arith.muli %arg0, %c3_i32 : i32
    %1 = arith.addi %0, %arg1 : i32
    %c1_i32 = arith.constant 1 : i32
    %2 = arith.muli %1, %c1_i32 : i32
    %3 = arith.addi %2, %arg2 : i32
    %4 = arith.index_cast %3 : i32 to index
    %5 = memref.load %arg4[%4] : memref<3xi32, #tpu.memory_space<smem>>
    %6 = arith.index_cast %3 : i32 to index
    %7 = memref.load %arg5[%6] : memref<3xi32, #tpu.memory_space<smem>>
    %c0_i32 = arith.constant 0 : i32
    %c0_i32_0 = arith.constant 0 : i32
    return %5, %c0_i32, %7 : i32, i32, i32
  }
  func.func @transform_3(%arg0: i32, %arg1: i32, %arg2: i32, %arg3: memref<3xi32, #tpu.memory_space<smem>>, %arg4: memref<3xi32, #tpu.memory_space<smem>>, %arg5: memref<3xi32, #tpu.memory_space<smem>>) -> (i32, i32, i32) {
    %c3_i32 = arith.constant 3 : i32
    %0 = arith.muli %arg0, %c3_i32 : i32
    %1 = arith.addi %0, %arg1 : i32
    %c1_i32 = arith.constant 1 : i32
    %2 = arith.muli %1, %c1_i32 : i32
    %3 = arith.addi %2, %arg2 : i32
    %4 = arith.index_cast %3 : i32 to index
    %5 = memref.load %arg4[%4] : memref<3xi32, #tpu.memory_space<smem>>
    %6 = arith.index_cast %3 : i32 to index
    %7 = memref.load %arg5[%6] : memref<3xi32, #tpu.memory_space<smem>>
    %c0_i32 = arith.constant 0 : i32
    %c0_i32_0 = arith.constant 0 : i32
    return %5, %c0_i32, %7 : i32, i32, i32
  }
  func.func @transform_4(%arg0: i32, %arg1: i32, %arg2: i32, %arg3: memref<3xi32, #tpu.memory_space<smem>>, %arg4: memref<3xi32, #tpu.memory_space<smem>>, %arg5: memref<3xi32, #tpu.memory_space<smem>>) -> (i32, i32, i32) {
    %c3_i32 = arith.constant 3 : i32
    %0 = arith.muli %arg0, %c3_i32 : i32
    %1 = arith.addi %0, %arg1 : i32
    %c1_i32 = arith.constant 1 : i32
    %2 = arith.muli %1, %c1_i32 : i32
    %3 = arith.addi %2, %arg2 : i32
    %4 = arith.index_cast %3 : i32 to index
    %5 = memref.load %arg4[%4] : memref<3xi32, #tpu.memory_space<smem>>
    %6 = arith.index_cast %3 : i32 to index
    %7 = memref.load %arg5[%6] : memref<3xi32, #tpu.memory_space<smem>>
    %c0_i32 = arith.constant 0 : i32
    %c0_i32_0 = arith.constant 0 : i32
    return %5, %7, %c0_i32 : i32, i32, i32
  }
  func.func @transform_5(%arg0: i32, %arg1: i32, %arg2: i32, %arg3: memref<3xi32, #tpu.memory_space<smem>>, %arg4: memref<3xi32, #tpu.memory_space<smem>>, %arg5: memref<3xi32, #tpu.memory_space<smem>>) -> (i32, i32, i32) {
    %c3_i32 = arith.constant 3 : i32
    %0 = arith.muli %arg0, %c3_i32 : i32
    %1 = arith.addi %0, %arg1 : i32
    %c1_i32 = arith.constant 1 : i32
    %2 = arith.muli %1, %c1_i32 : i32
    %3 = arith.addi %2, %arg2 : i32
    %4 = arith.index_cast %3 : i32 to index
    %5 = memref.load %arg4[%4] : memref<3xi32, #tpu.memory_space<smem>>
    %c0_i32 = arith.constant 0 : i32
    %c0_i32_0 = arith.constant 0 : i32
    %c0_i32_1 = arith.constant 0 : i32
    return %5, %c0_i32, %c0_i32_0 : i32, i32, i32
  }
  func.func @transform_6(%arg0: i32, %arg1: i32, %arg2: i32, %arg3: memref<3xi32, #tpu.memory_space<smem>>, %arg4: memref<3xi32, #tpu.memory_space<smem>>, %arg5: memref<3xi32, #tpu.memory_space<smem>>) -> (i32, i32, i32) {
    %c3_i32 = arith.constant 3 : i32
    %0 = arith.muli %arg0, %c3_i32 : i32
    %1 = arith.addi %0, %arg1 : i32
    %c1_i32 = arith.constant 1 : i32
    %2 = arith.muli %1, %c1_i32 : i32
    %3 = arith.addi %2, %arg2 : i32
    %4 = arith.index_cast %3 : i32 to index
    %5 = memref.load %arg4[%4] : memref<3xi32, #tpu.memory_space<smem>>
    %c0_i32 = arith.constant 0 : i32
    %c0_i32_0 = arith.constant 0 : i32
    %c0_i32_1 = arith.constant 0 : i32
    return %5, %c0_i32, %c0_i32_0 : i32, i32, i32
  }
  func.func @transform_7(%arg0: i32, %arg1: i32, %arg2: i32, %arg3: memref<3xi32, #tpu.memory_space<smem>>, %arg4: memref<3xi32, #tpu.memory_space<smem>>, %arg5: memref<3xi32, #tpu.memory_space<smem>>) -> (i32, i32, i32) {
    %c3_i32 = arith.constant 3 : i32
    %0 = arith.muli %arg0, %c3_i32 : i32
    %1 = arith.addi %0, %arg1 : i32
    %c1_i32 = arith.constant 1 : i32
    %2 = arith.muli %1, %c1_i32 : i32
    %3 = arith.addi %2, %arg2 : i32
    %4 = arith.index_cast %3 : i32 to index
    %5 = memref.load %arg4[%4] : memref<3xi32, #tpu.memory_space<smem>>
    %c0_i32 = arith.constant 0 : i32
    %c0_i32_0 = arith.constant 0 : i32
    %c0_i32_1 = arith.constant 0 : i32
    return %5, %c0_i32, %c0_i32_0 : i32, i32, i32
  }
  func.func @transform_8(%arg0: i32, %arg1: i32, %arg2: i32, %arg3: memref<3xi32, #tpu.memory_space<smem>>, %arg4: memref<3xi32, #tpu.memory_space<smem>>, %arg5: memref<3xi32, #tpu.memory_space<smem>>) -> (i32, i32) {
    %c0_i32 = arith.constant 0 : i32
    %c0_i32_0 = arith.constant 0 : i32
    return %arg0, %c0_i32 : i32, i32
  }
}

</mosaic_0001>

<llo_original>
// kernel: tpu_custom_call.1
$region0: #{tpu_custom_call.1}
  #allocation0 [shape = 'u32[]', space=smem, size = 0x4, offset = 0x4, fixed_abs, tag = 'smem constant byte address 0x4 - core index']
  #allocation1 [shape = 'u32[72,128]{1,0:T(1,128)}', space=vmem, size = 0x9000, scoped, tag = 'internal scratch']
  #allocation2 [shape = 'f32[32,128]{1,0:T(8,128)}', space=vmem, size = 0x4000, scoped, tag = 'scratch operand']
  #allocation3 [shape = 's32[1]{0}', space=sflag, size = 0x4, scoped, tag = 'scoped memory for tpu_custom_call.1']
  #allocation4 [shape = 'u8[512]{0}', space=smem, size = 0x200, scoped, tag = 'prefetched SMEM operand 0']
  #allocation5 [shape = 'u8[512]{0}', space=smem, size = 0x200, scoped, tag = 'prefetched SMEM operand 1']
  #allocation6 [shape = 'u8[512]{0}', space=smem, size = 0x200, scoped, tag = 'prefetched SMEM operand 2']
  %s0 = inlined_call_operand.hbm [shape: s32[3], index: 0, kind: input, shape index: {}]
  %s1 = inlined_call_operand.hbm [shape: s32[3], index: 1, kind: input, shape index: {}]
  %s2 = inlined_call_operand.hbm [shape: s32[3], index: 2, kind: input, shape index: {}]
  %s3 = inlined_call_operand.vmem [shape: f32[32,128], index: 3, kind: input, shape index: {}]
  %s4 = inlined_call_operand.vmem [shape: s32[32,1], index: 4, kind: input, shape index: {}]
  %s5 = inlined_call_operand.hbm [shape: f32[3,128,256], index: 5, kind: input, shape index: {}]
  %s6 = inlined_call_operand.vmem [shape: f32[3,1,256], index: 6, kind: input, shape index: {}]
  %s7 = inlined_call_operand.hbm [shape: f32[3,256,128], index: 7, kind: input, shape index: {}]
  %s8 = inlined_call_operand.hbm [shape: f32[3,1,128], index: 8, kind: input, shape index: {}]
  %s9 = inlined_call_operand.vmem [shape: f32[3,1,128], index: 9, kind: input, shape index: {}]
  %s10 = inlined_call_operand.hbm [shape: f32[3,1,128], index: 10, kind: input, shape index: {}]
  %s11 = inlined_call_operand.hbm [shape: f32[32,128], index: 11, kind: output, shape index: {}]
  %s12 = sld [smem:[#allocation0]]
  $region97: #{tpu_custom_call.1} parent=0
    _
  %s14 = ssub.s32 1, %s12
  %s15 = scalar_select 0, %s14, %s12
  %s17 = sshll.u32 %s0, 4
  %s18 = int_to_ptr.hbm [resolvable:$true] %s17
  %20 = dma.hbm_to_smem %s18, 16, [#allocation4], [#allocation3]
  %s22 = sshll.u32 %s1, 4
  %s23 = int_to_ptr.hbm [resolvable:$true] %s22
  %25 = dma.hbm_to_smem %s23, 16, [#allocation5], [#allocation3]
  %s27 = sshll.u32 %s2, 4
  %s28 = int_to_ptr.hbm [resolvable:$true] %s27
  %30 = dma.hbm_to_smem %s28, 16, [#allocation6], [#allocation3]
  %32 = dma.done [#allocation3], 48
  %33 = sfence
  $region1: #{tpu_custom_call.1} parent=0
    #allocation7 [shape = 'u8[262144]{0}', space=vmem, size = 0x40000, scoped, tag = 'input window, operand 5']
    #allocation8 [shape = 's32[2]{0}', space=sflag, size = 0x8, scoped, tag = 'scoped memory for tpu_custom_call.1']
    #allocation9 [shape = 's32[2]{0}', space=sflag, size = 0x8, scoped, tag = 'scoped memory for tpu_custom_call.1']
    #allocation10 [shape = 'u8[262144]{0}', space=vmem, size = 0x40000, scoped, tag = 'input window, operand 7']
    #allocation11 [shape = 's32[2]{0}', space=sflag, size = 0x8, scoped, tag = 'scoped memory for tpu_custom_call.1']
    #allocation12 [shape = 'u8[1024]{0}', space=vmem, size = 0x400, scoped, tag = 'input window, operand 8']
    #allocation13 [shape = 'u8[1024]{0}', space=vmem, size = 0x400, scoped, tag = 'input window, operand 10']
    #allocation14 [shape = 's32[2]{0}', space=sflag, size = 0x8, scoped, tag = 'scoped memory for tpu_custom_call.1']
    #allocation15 [shape = 'u8[16384]{0}', space=vmem, size = 0x4000, scoped, tag = 'output window, operand 0, single buffered']
    %34 = vsyncpa [#allocation8], 0
    %s35 = scalar_lea.sflag [#allocation8], 1
    %36 = vsyncpa %s35, 0
    %37 = vsyncpa [#allocation11], 0
    %s38 = scalar_lea.sflag [#allocation11], 1
    %39 = vsyncpa %s38, 0
    %40 = vsyncpa [#allocation14], 0
    %s41 = scalar_lea.sflag [#allocation14], 1
    %42 = vsyncpa %s41, 0
    %43 = vsyncpa [#allocation9], 0
    loop: start=0, step=1, limit=5
    $region2: #{tpu_custom_call.1} parent=1 // loop_pre_header
      _
    $region3: #{tpu_custom_call.1} parent=1 // loop_header
      %s45 = sphi 0, %s49
      %p46 = scmp.ge.s32.totalorder %s45, 5
      %s52 = sphi 0, %s71
      %s53 = sphi 0, %s67
      %s54 = sphi 0, %s63
      %s55 = sphi 0, %s52
      %s56 = sphi 0, %s53
      %s57 = sphi 0, %s54
      %s58 = sphi 0, %s55
      %s59 = sphi 0, %s56
      %s60 = sphi 0, %s57
      %s74 = sphi 0, %s76
      %s77 = sphi 0, %s74
      %s78 = sphi 0, %s77
      %s94 = sphi 0, %s78
      %s100 = sphi 0, %s102
      %s103 = sphi 0, %s100
      %s104 = sphi 0, %s103
      %s120 = sphi 0, %s104
      %s138 = sphi 0, %s140
      %s141 = sphi 0, %s138
      %s142 = sphi 0, %s141
      %s158 = sphi 0, %s142
      %s176 = sphi 0, %s178
      %s179 = sphi 0, %s176
      %s180 = sphi 0, %s179
      %s196 = sphi 0, %s180
      %s214 = sphi 0, %s216
      %s217 = sphi 0, %s214
      %s218 = sphi 0, %s217
      %s234 = sphi 0, %s218
      %s248 = sphi 0, %s250
      %s251 = sphi 0, %s248
      %s252 = sphi 0, %s251
      %s268 = sphi 0, %s252
      %s282 = sphi 0, %s284
      %s285 = sphi 0, %s282
      %s286 = sphi 0, %s285
      %s302 = sphi 0, %s286
      %s316 = sphi 0, %s318
      %s319 = sphi 0, %s316
      %s320 = sphi 0, %s319
      %s336 = sphi 0, %s320
      %s342 = sphi 0, %s344
      %s345 = sphi 0, %s342
      %s346 = sphi 0, %s345
      %s362 = sphi 0, %s346
    $region4: #{tpu_custom_call.1} parent=1 // loop_header_branch
      %48 = sbr.rel (%p46) target = $region8
    $region5: #{tpu_custom_call.1} parent=1 // loop_body
      %s50 = ssub.s32 %s45, 1
      %s51 = ssub.s32 %s45, 2
      %s61 = sadd.s32 1, %s54
      %p62 = scmp.ge.s32.totalorder %s61, 1
      %s63 = scalar_select %p62, 0, %s61
      %s64 = sadd.s32 1, %s53
      %s65 = scalar_select %p62, %s64, %s53
      %p66 = scmp.ge.s32.totalorder %s65, 3
      %s67 = scalar_select %p66, 0, %s65
      %s68 = sadd.s32 1, %s52
      %s69 = scalar_select %p66, %s68, %s52
      %p70 = scmp.ge.s32.totalorder %s69, 1
      %s71 = scalar_select %p70, 0, %s69
      %s72 = ssub.s32 %s52, %s71
      %p73 = scmp.eq.s32.totalorder %s72, 0
      %s75 = sadd.s32 %s74, 1
      %s76 = scalar_select %p73, %s74, %s75
      %p79 = pneg %p73
      %p80 = scmp.eq.s32.totalorder %s45, 2
      %p81 = por %p79, %p80
      %p82 = scmp.ne.s32.totalorder %s74, %s77
      %p83 = scmp.eq.s32.totalorder %s45, 0
      %p84 = por %p82, %p83
      %p85 = scmp.ne.s32.totalorder %s74, %s77
      %p86 = scmp.eq.s32.totalorder %s50, 2
      %p87 = por %p85, %p86
      %p88 = scmp.ne.s32.totalorder %s77, %s78
      %p89 = scmp.eq.s32.totalorder %s50, 0
      %p90 = por %p88, %p89
      %p91 = scmp.ne.s32.totalorder %s77, %s78
      %p92 = scmp.eq.s32.totalorder %s51, 2
      %p93 = por %p91, %p92
      %p95 = scmp.ne.s32.totalorder %s78, %s94
      %p96 = scmp.eq.s32.totalorder %s51, 0
      %p97 = por %p95, %p96
      %s98 = ssub.s32 %s52, %s71
      %p99 = scmp.eq.s32.totalorder %s98, 0
      %s101 = sadd.s32 %s100, 1
      %s102 = scalar_select %p99, %s100, %s101
      %p105 = pneg %p99
      %p106 = scmp.eq.s32.totalorder %s45, 2
      %p107 = por %p105, %p106
      %p108 = scmp.ne.s32.totalorder %s100, %s103
      %p109 = scmp.eq.s32.totalorder %s45, 0
      %p110 = por %p108, %p109
      %p111 = scmp.ne.s32.totalorder %s100, %s103
      %p112 = scmp.eq.s32.totalorder %s50, 2
      %p113 = por %p111, %p112
      %p114 = scmp.ne.s32.totalorder %s103, %s104
      %p115 = scmp.eq.s32.totalorder %s50, 0
      %p116 = por %p114, %p115
      %p117 = scmp.ne.s32.totalorder %s103, %s104
      %p118 = scmp.eq.s32.totalorder %s51, 2
      %p119 = por %p117, %p118
      %p121 = scmp.ne.s32.totalorder %s104, %s120
      %p122 = scmp.eq.s32.totalorder %s51, 0
      %p123 = por %p121, %p122
      %s124 = smul.u32 %s52, 3
      %s125 = sadd.s32 %s124, %s53
      %s126 = sadd.s32 %s125, %s54
      %s127 = sld [smem:[#allocation5 + %s126]]
      %s128 = sld [smem:[#allocation6 + %s126]]
      %s129 = smul.u32 %s71, 3
      %s130 = sadd.s32 %s129, %s67
      %s131 = sadd.s32 %s130, %s63
      %s132 = sld [smem:[#allocation5 + %s131]]
      %s133 = sld [smem:[#allocation6 + %s131]]
      %s134 = ssub.s32 %s127, %s132
      %s135 = ssub.s32 %s128, %s133
      %s136 = sor.u32 %s134, %s135
      %p137 = scmp.eq.s32.totalorder %s136, 0
      %s139 = sadd.s32 %s138, 1
      %s140 = scalar_select %p137, %s138, %s139
      %p143 = pneg %p137
      %p144 = scmp.eq.s32.totalorder %s45, 2
      %p145 = por %p143, %p144
      %p146 = scmp.ne.s32.totalorder %s138, %s141
      %p147 = scmp.eq.s32.totalorder %s45, 0
      %p148 = por %p146, %p147
      %p149 = scmp.ne.s32.totalorder %s138, %s141
      %p150 = scmp.eq.s32.totalorder %s50, 2
      %p151 = por %p149, %p150
      %p152 = scmp.ne.s32.totalorder %s141, %s142
      %p153 = scmp.eq.s32.totalorder %s50, 0
      %p154 = por %p152, %p153
      %p155 = scmp.ne.s32.totalorder %s141, %s142
      %p156 = scmp.eq.s32.totalorder %s51, 2
      %p157 = por %p155, %p156
      %p159 = scmp.ne.s32.totalorder %s142, %s158
      %p160 = scmp.eq.s32.totalorder %s51, 0
      %p161 = por %p159, %p160
      %s162 = smul.u32 %s52, 3
      %s163 = sadd.s32 %s162, %s53
      %s164 = sadd.s32 %s163, %s54
      %s165 = sld [smem:[#allocation5 + %s164]]
      %s166 = sld [smem:[#allocation6 + %s164]]
      %s167 = smul.u32 %s71, 3
      %s168 = sadd.s32 %s167, %s67
      %s169 = sadd.s32 %s168, %s63
      %s170 = sld [smem:[#allocation5 + %s169]]
      %s171 = sld [smem:[#allocation6 + %s169]]
      %s172 = ssub.s32 %s165, %s170
      %s173 = ssub.s32 %s166, %s171
      %s174 = sor.u32 %s172, %s173
      %p175 = scmp.eq.s32.totalorder %s174, 0
      %s177 = sadd.s32 %s176, 1
      %s178 = scalar_select %p175, %s176, %s177
      %p181 = pneg %p175
      %p182 = scmp.eq.s32.totalorder %s45, 2
      %p183 = por %p181, %p182
      %p184 = scmp.ne.s32.totalorder %s176, %s179
      %p185 = scmp.eq.s32.totalorder %s45, 0
      %p186 = por %p184, %p185
      %p187 = scmp.ne.s32.totalorder %s176, %s179
      %p188 = scmp.eq.s32.totalorder %s50, 2
      %p189 = por %p187, %p188
      %p190 = scmp.ne.s32.totalorder %s179, %s180
      %p191 = scmp.eq.s32.totalorder %s50, 0
      %p192 = por %p190, %p191
      %p193 = scmp.ne.s32.totalorder %s179, %s180
      %p194 = scmp.eq.s32.totalorder %s51, 2
      %p195 = por %p193, %p194
      %p197 = scmp.ne.s32.totalorder %s180, %s196
      %p198 = scmp.eq.s32.totalorder %s51, 0
      %p199 = por %p197, %p198
      %s200 = smul.u32 %s52, 3
      %s201 = sadd.s32 %s200, %s53
      %s202 = sadd.s32 %s201, %s54
      %s203 = sld [smem:[#allocation5 + %s202]]
      %s204 = sld [smem:[#allocation6 + %s202]]
      %s205 = smul.u32 %s71, 3
      %s206 = sadd.s32 %s205, %s67
      %s207 = sadd.s32 %s206, %s63
      %s208 = sld [smem:[#allocation5 + %s207]]
      %s209 = sld [smem:[#allocation6 + %s207]]
      %s210 = ssub.s32 %s203, %s208
      %s211 = ssub.s32 %s204, %s209
      %s212 = sor.u32 %s210, %s211
      %p213 = scmp.eq.s32.totalorder %s212, 0
      %s215 = sadd.s32 %s214, 1
      %s216 = scalar_select %p213, %s214, %s215
      %p219 = pneg %p213
      %p220 = scmp.eq.s32.totalorder %s45, 2
      %p221 = por %p219, %p220
      %p222 = scmp.ne.s32.totalorder %s214, %s217
      %p223 = scmp.eq.s32.totalorder %s45, 0
      %p224 = por %p222, %p223
      %p225 = scmp.ne.s32.totalorder %s214, %s217
      %p226 = scmp.eq.s32.totalorder %s50, 2
      %p227 = por %p225, %p226
      %p228 = scmp.ne.s32.totalorder %s217, %s218
      %p229 = scmp.eq.s32.totalorder %s50, 0
      %p230 = por %p228, %p229
      %p231 = scmp.ne.s32.totalorder %s217, %s218
      %p232 = scmp.eq.s32.totalorder %s51, 2
      %p233 = por %p231, %p232
      %p235 = scmp.ne.s32.totalorder %s218, %s234
      %p236 = scmp.eq.s32.totalorder %s51, 0
      %p237 = por %p235, %p236
      %s238 = smul.u32 %s52, 3
      %s239 = sadd.s32 %s238, %s53
      %s240 = sadd.s32 %s239, %s54
      %s241 = sld [smem:[#allocation5 + %s240]]
      %s242 = smul.u32 %s71, 3
      %s243 = sadd.s32 %s242, %s67
      %s244 = sadd.s32 %s243, %s63
      %s245 = sld [smem:[#allocation5 + %s244]]
      %s246 = ssub.s32 %s241, %s245
      %p247 = scmp.eq.s32.totalorder %s246, 0
      %s249 = sadd.s32 %s248, 1
      %s250 = scalar_select %p247, %s248, %s249
      %p253 = pneg %p247
      %p254 = scmp.eq.s32.totalorder %s45, 2
      %p255 = por %p253, %p254
      %p256 = scmp.ne.s32.totalorder %s248, %s251
      %p257 = scmp.eq.s32.totalorder %s45, 0
      %p258 = por %p256, %p257
      %p259 = scmp.ne.s32.totalorder %s248, %s251
      %p260 = scmp.eq.s32.totalorder %s50, 2
      %p261 = por %p259, %p260
      %p262 = scmp.ne.s32.totalorder %s251, %s252
      %p263 = scmp.eq.s32.totalorder %s50, 0
      %p264 = por %p262, %p263
      %p265 = scmp.ne.s32.totalorder %s251, %s252
      %p266 = scmp.eq.s32.totalorder %s51, 2
      %p267 = por %p265, %p266
      %p269 = scmp.ne.s32.totalorder %s252, %s268
      %p270 = scmp.eq.s32.totalorder %s51, 0
      %p271 = por %p269, %p270
      %s272 = smul.u32 %s52, 3
      %s273 = sadd.s32 %s272, %s53
      %s274 = sadd.s32 %s273, %s54
      %s275 = sld [smem:[#allocation5 + %s274]]
      %s276 = smul.u32 %s71, 3
      %s277 = sadd.s32 %s276, %s67
      %s278 = sadd.s32 %s277, %s63
      %s279 = sld [smem:[#allocation5 + %s278]]
      %s280 = ssub.s32 %s275, %s279
      %p281 = scmp.eq.s32.totalorder %s280, 0
      %s283 = sadd.s32 %s282, 1
      %s284 = scalar_select %p281, %s282, %s283
      %p287 = pneg %p281
      %p288 = scmp.eq.s32.totalorder %s45, 2
      %p289 = por %p287, %p288
      %p290 = scmp.ne.s32.totalorder %s282, %s285
      %p291 = scmp.eq.s32.totalorder %s45, 0
      %p292 = por %p290, %p291
      %p293 = scmp.ne.s32.totalorder %s282, %s285
      %p294 = scmp.eq.s32.totalorder %s50, 2
      %p295 = por %p293, %p294
      %p296 = scmp.ne.s32.totalorder %s285, %s286
      %p297 = scmp.eq.s32.totalorder %s50, 0
      %p298 = por %p296, %p297
      %p299 = scmp.ne.s32.totalorder %s285, %s286
      %p300 = scmp.eq.s32.totalorder %s51, 2
      %p301 = por %p299, %p300
      %p303 = scmp.ne.s32.totalorder %s286, %s302
      %p304 = scmp.eq.s32.totalorder %s51, 0
      %p305 = por %p303, %p304
      %s306 = smul.u32 %s52, 3
      %s307 = sadd.s32 %s306, %s53
      %s308 = sadd.s32 %s307, %s54
      %s309 = sld [smem:[#allocation5 + %s308]]
      %s310 = smul.u32 %s71, 3
      %s311 = sadd.s32 %s310, %s67
      %s312 = sadd.s32 %s311, %s63
      %s313 = sld [smem:[#allocation5 + %s312]]
      %s314 = ssub.s32 %s309, %s313
      %p315 = scmp.eq.s32.totalorder %s314, 0
      %s317 = sadd.s32 %s316, 1
      %s318 = scalar_select %p315, %s316, %s317
      %p321 = pneg %p315
      %p322 = scmp.eq.s32.totalorder %s45, 2
      %p323 = por %p321, %p322
      %p324 = scmp.ne.s32.totalorder %s316, %s319
      %p325 = scmp.eq.s32.totalorder %s45, 0
      %p326 = por %p324, %p325
      %p327 = scmp.ne.s32.totalorder %s316, %s319
      %p328 = scmp.eq.s32.totalorder %s50, 2
      %p329 = por %p327, %p328
      %p330 = scmp.ne.s32.totalorder %s319, %s320
      %p331 = scmp.eq.s32.totalorder %s50, 0
      %p332 = por %p330, %p331
      %p333 = scmp.ne.s32.totalorder %s319, %s320
      %p334 = scmp.eq.s32.totalorder %s51, 2
      %p335 = por %p333, %p334
      %p337 = scmp.ne.s32.totalorder %s320, %s336
      %p338 = scmp.eq.s32.totalorder %s51, 0
      %p339 = por %p337, %p338
      %s340 = ssub.s32 %s52, %s71
      %p341 = scmp.eq.s32.totalorder %s340, 0
      %s343 = sadd.s32 %s342, 1
      %s344 = scalar_select %p341, %s342, %s343
      %p347 = pneg %p341
      %p348 = scmp.eq.s32.totalorder %s45, 2
      %p349 = por %p347, %p348
      %p350 = scmp.ne.s32.totalorder %s342, %s345
      %p351 = scmp.eq.s32.totalorder %s45, 0
      %p352 = por %p350, %p351
      %p353 = scmp.ne.s32.totalorder %s342, %s345
      %p354 = scmp.eq.s32.totalorder %s50, 2
      %p355 = por %p353, %p354
      %p356 = scmp.ne.s32.totalorder %s345, %s346
      %p357 = scmp.eq.s32.totalorder %s50, 0
      %p358 = por %p356, %p357
      %p359 = scmp.ne.s32.totalorder %s345, %s346
      %p360 = scmp.eq.s32.totalorder %s51, 2
      %p361 = por %p359, %p360
      %p363 = scmp.ne.s32.totalorder %s346, %s362
      %p364 = scmp.eq.s32.totalorder %s51, 0
      %p365 = por %p363, %p364
      %p366 = scmp.le.s32.totalorder 1, %s45
      %p367 = scmp.lt.s32.totalorder %s45, 4
      %p368 = pnand %p366, %p367
      %p369 = pneg %p368
      // Predicated region
      $region9: #{tpu_custom_call.1} parent=5 // pred_check
        _
      $region10: #{tpu_custom_call.1} parent=5 // pred_check_branch
        %371 = sbr.rel (%p368) target = $region12
      $region11: #{tpu_custom_call.1} parent=5 // pred_region
        %s372 = ssub.s32 %s45, 1
        // Predicated region
        $region13: #{tpu_custom_call.1} parent=11 // pred_check
          %p373 = pneg %p90
        $region14: #{tpu_custom_call.1} parent=11 // pred_check_branch
          %375 = sbr.rel (%p373) target = $region16
        $region15: #{tpu_custom_call.1} parent=11 // pred_region
          %s376 = smul.u32 4, %s55
          %p377 = scmp.lt.s32.totalorder %s376, 3
          %s378 = scalar_select %p377, %s376, 3
          %s379 = smul.addr %s378, 8
          %s380 = scalar_lea.vmem %s3, %s379
          %s381 = smul.u32 4, %s55
        $region16: #{tpu_custom_call.1} parent=11 // pred_fallthru
          _
        // Predicated region
        $region17: #{tpu_custom_call.1} parent=11 // pred_check
          %p382 = pneg %p116
        $region18: #{tpu_custom_call.1} parent=11 // pred_check_branch
          %384 = sbr.rel (%p382) target = $region20
        $region19: #{tpu_custom_call.1} parent=11 // pred_region
          %s385 = smul.u32 4, %s55
          %p386 = scmp.lt.s32.totalorder %s385, 3
          %s387 = scalar_select %p386, %s385, 3
          %s388 = smul.addr %s387, 8
          %s389 = scalar_lea.vmem %s4, %s388
          %s390 = smul.u32 4, %s55
        $region20: #{tpu_custom_call.1} parent=11 // pred_fallthru
          _
      $region12: #{tpu_custom_call.1} parent=5 // pred_fallthru
        _
      %p391 = scmp.lt.s32.totalorder %s45, 3
      // Predicated region
      $region21: #{tpu_custom_call.1} parent=5 // pred_check
        %p392 = pneg %p391
      $region22: #{tpu_custom_call.1} parent=5 // pred_check_branch
        %394 = sbr.rel (%p392) target = $region24
      $region23: #{tpu_custom_call.1} parent=5 // pred_region
        // Predicated region
        $region25: #{tpu_custom_call.1} parent=23 // pred_check
          %p395 = pneg %p148
        $region26: #{tpu_custom_call.1} parent=23 // pred_check_branch
          %397 = sbr.rel (%p395) target = $region28
        $region27: #{tpu_custom_call.1} parent=23 // pred_region
          %s398 = sand.u32 %s138, 1
          %s399 = scalar_lea.sflag [#allocation8], %s398
          %s400 = sand.u32 %s138, 1
          %s401 = smul.addr %s400, 256
          %s402 = scalar_lea.vmem [#allocation7], %s401
          %s403 = smul.u32 %s52, 3
          %s404 = sadd.s32 %s403, %s53
          %s405 = sadd.s32 %s404, %s54
          %s406 = sld [smem:[#allocation5 + %s405]]
          %s407 = sld [smem:[#allocation6 + %s405]]
          %s408 = smul.u32 2, %s407
          %410 = vsyncadd %s399, 0
          %s411 = smul.addr %s406, 32
          %s412 = sadd.s32 %s408, %s411
          %s413 = smul.addr %s412, 8
          %s414 = scalar_lea.hbm %s5, %s413
          %s415 = sshll.u32 %s414, 4
          %s416 = int_to_ptr.hbm [resolvable:$true] %s415
          %s417 = sshll.u32 %s402, 4
          %s418 = int_to_ptr.vmem [resolvable:$true] %s417
          %423 = dma.hbm_to_vmem [thread:$0]  %s416, 4096, %s418, %s399, 256, 256, 16
        $region28: #{tpu_custom_call.1} parent=23 // pred_fallthru
          _
        // Predicated region
        $region29: #{tpu_custom_call.1} parent=23 // pred_check
          %p424 = pneg %p186
        $region30: #{tpu_custom_call.1} parent=23 // pred_check_branch
          %426 = sbr.rel (%p424) target = $region32
        $region31: #{tpu_custom_call.1} parent=23 // pred_region
          %s427 = smul.u32 %s52, 3
          %s428 = sadd.s32 %s427, %s53
          %s429 = sadd.s32 %s428, %s54
          %s430 = sld [smem:[#allocation5 + %s429]]
          %s431 = sld [smem:[#allocation6 + %s429]]
          %s432 = smul.u32 2, %s431
          %p433 = scmp.lt.s32.totalorder %s430, 2
          %s434 = scalar_select %p433, %s430, 2
          %p435 = scmp.lt.s32.totalorder %s432, 1
          %s436 = scalar_select %p435, %s432, 1
          %s437 = smul.addr %s434, 2
          %s438 = sadd.s32 %s436, %s437
          %s439 = scalar_lea.vmem %s6, %s438
          %s440 = smul.u32 %s52, 3
          %s441 = sadd.s32 %s440, %s53
          %s442 = sadd.s32 %s441, %s54
          %s443 = sld [smem:[#allocation5 + %s442]]
          %s444 = sld [smem:[#allocation6 + %s442]]
          %s445 = smul.u32 2, %s444
        $region32: #{tpu_custom_call.1} parent=23 // pred_fallthru
          _
        // Predicated region
        $region33: #{tpu_custom_call.1} parent=23 // pred_check
          %p446 = pneg %p224
        $region34: #{tpu_custom_call.1} parent=23 // pred_check_branch
          %448 = sbr.rel (%p446) target = $region36
        $region35: #{tpu_custom_call.1} parent=23 // pred_region
          %s449 = sand.u32 %s45, 1
          %s450 = scalar_lea.sflag [#allocation11], %s449
          %s451 = sand.u32 %s214, 1
          %s452 = smul.addr %s451, 256
          %s453 = scalar_lea.vmem [#allocation10], %s452
          %s454 = smul.u32 %s52, 3
          %s455 = sadd.s32 %s454, %s53
          %s456 = sadd.s32 %s455, %s54
          %s457 = sld [smem:[#allocation5 + %s456]]
          %s458 = sld [smem:[#allocation6 + %s456]]
          %s459 = smul.u32 32, %s458
          %461 = vsyncadd %s450, 0
          %s462 = smul.addr %s457, 32
          %s463 = sadd.s32 %s459, %s462
          %s464 = smul.addr %s463, 8
          %s465 = scalar_lea.hbm %s7, %s464
          %s466 = sshll.u32 %s465, 4
          %s467 = int_to_ptr.hbm [resolvable:$true] %s466
          %s468 = sshll.u32 %s453, 4
          %s469 = int_to_ptr.vmem [resolvable:$true] %s468
          %474 = dma.hbm_to_vmem [thread:$0]  %s467, 4096, %s469, %s450, 128, 128, 8
        $region36: #{tpu_custom_call.1} parent=23 // pred_fallthru
          _
        // Predicated region
        $region37: #{tpu_custom_call.1} parent=23 // pred_check
          %p475 = pneg %p258
        $region38: #{tpu_custom_call.1} parent=23 // pred_check_branch
          %477 = sbr.rel (%p475) target = $region40
        $region39: #{tpu_custom_call.1} parent=23 // pred_region
          %s478 = sand.u32 %s45, 1
          %s479 = scalar_lea.sflag [#allocation11], %s478
          %s480 = sand.u32 %s248, 1
          %s481 = scalar_lea.vmem [#allocation12], %s480
          %s482 = smul.u32 %s52, 3
          %s483 = sadd.s32 %s482, %s53
          %s484 = sadd.s32 %s483, %s54
          %s485 = sld [smem:[#allocation5 + %s484]]
          %487 = vsyncadd %s479, 0
          %s488 = scalar_lea.hbm %s8, %s485
          %s490 = sshll.u32 %s488, 4
          %s491 = int_to_ptr.hbm [resolvable:$true] %s490
          %s492 = sshll.u32 %s481, 4
          %s493 = int_to_ptr.vmem [resolvable:$true] %s492
          %495 = dma.hbm_to_vmem [thread:$0]  %s491, 16, %s493, %s479
        $region40: #{tpu_custom_call.1} parent=23 // pred_fallthru
          _
        // Predicated region
        $region41: #{tpu_custom_call.1} parent=23 // pred_check
          %p496 = pneg %p292
        $region42: #{tpu_custom_call.1} parent=23 // pred_check_branch
          %498 = sbr.rel (%p496) target = $region44
        $region43: #{tpu_custom_call.1} parent=23 // pred_region
          %s499 = smul.u32 %s52, 3
          %s500 = sadd.s32 %s499, %s53
          %s501 = sadd.s32 %s500, %s54
          %s502 = sld [smem:[#allocation5 + %s501]]
          %p503 = scmp.lt.s32.totalorder %s502, 2
          %s504 = scalar_select %p503, %s502, 2
          %s505 = scalar_lea.vmem %s9, %s504
          %s506 = smul.u32 %s52, 3
          %s507 = sadd.s32 %s506, %s53
          %s508 = sadd.s32 %s507, %s54
          %s509 = sld [smem:[#allocation5 + %s508]]
        $region44: #{tpu_custom_call.1} parent=23 // pred_fallthru
          _
        // Predicated region
        $region45: #{tpu_custom_call.1} parent=23 // pred_check
          %p510 = pneg %p326
        $region46: #{tpu_custom_call.1} parent=23 // pred_check_branch
          %512 = sbr.rel (%p510) target = $region48
        $region47: #{tpu_custom_call.1} parent=23 // pred_region
          %s513 = sand.u32 %s316, 1
          %s514 = scalar_lea.sflag [#allocation14], %s513
          %s515 = sand.u32 %s316, 1
          %s516 = scalar_lea.vmem [#allocation13], %s515
          %s517 = smul.u32 %s52, 3
          %s518 = sadd.s32 %s517, %s53
          %s519 = sadd.s32 %s518, %s54
          %s520 = sld [smem:[#allocation5 + %s519]]
          %522 = vsyncadd %s514, 0
          %s523 = scalar_lea.hbm %s10, %s520
          %s525 = sshll.u32 %s523, 4
          %s526 = int_to_ptr.hbm [resolvable:$true] %s525
          %s527 = sshll.u32 %s516, 4
          %s528 = int_to_ptr.vmem [resolvable:$true] %s527
          %530 = dma.hbm_to_vmem [thread:$0]  %s526, 16, %s528, %s514
        $region48: #{tpu_custom_call.1} parent=23 // pred_fallthru
          _
      $region24: #{tpu_custom_call.1} parent=5 // pred_fallthru
        _
      %p531 = scmp.le.s32.totalorder 1, %s45
      %p532 = scmp.lt.s32.totalorder %s45, 4
      %p533 = pnand %p531, %p532
      %p534 = pneg %p533
      // Predicated region
      $region49: #{tpu_custom_call.1} parent=5 // pred_check
        _
      $region50: #{tpu_custom_call.1} parent=5 // pred_check_branch
        %536 = sbr.rel (%p533) target = $region52
      $region51: #{tpu_custom_call.1} parent=5 // pred_region
        %s537 = ssub.s32 %s45, 1
        %s538 = sand.u32 %s141, 1
        %s539 = scalar_lea.sflag [#allocation8], %s538
        %s540 = sand.u32 %s141, 1
        %s541 = smul.addr %s540, 256
        %s542 = scalar_lea.vmem [#allocation7], %s541
        // Predicated region
        $region53: #{tpu_custom_call.1} parent=51 // pred_check
          %p543 = pneg %p154
        $region54: #{tpu_custom_call.1} parent=51 // pred_check_branch
          %545 = sbr.rel (%p543) target = $region56
        $region55: #{tpu_custom_call.1} parent=51 // pred_region
          %547 = dma.done %s539, 4096
        $region56: #{tpu_custom_call.1} parent=51 // pred_fallthru
          _
        %s548 = sand.u32 %s50, 1
        %s549 = scalar_lea.sflag [#allocation11], %s548
        %s550 = sand.u32 %s217, 1
        %s551 = smul.addr %s550, 256
        %s552 = scalar_lea.vmem [#allocation10], %s551
        // Predicated region
        $region57: #{tpu_custom_call.1} parent=51 // pred_check
          %p553 = pneg %p230
        $region58: #{tpu_custom_call.1} parent=51 // pred_check_branch
          %555 = sbr.rel (%p553) target = $region60
        $region59: #{tpu_custom_call.1} parent=51 // pred_region
          %557 = dma.done %s549, 4096
        $region60: #{tpu_custom_call.1} parent=51 // pred_fallthru
          _
        %s558 = sand.u32 %s50, 1
        %s559 = scalar_lea.sflag [#allocation11], %s558
        %s560 = sand.u32 %s251, 1
        %s561 = scalar_lea.vmem [#allocation12], %s560
        // Predicated region
        $region61: #{tpu_custom_call.1} parent=51 // pred_check
          %p562 = pneg %p264
        $region62: #{tpu_custom_call.1} parent=51 // pred_check_branch
          %564 = sbr.rel (%p562) target = $region64
        $region63: #{tpu_custom_call.1} parent=51 // pred_region
          %566 = dma.done %s559, 16
        $region64: #{tpu_custom_call.1} parent=51 // pred_fallthru
          _
        %s567 = sand.u32 %s319, 1
        %s568 = scalar_lea.sflag [#allocation14], %s567
        %s569 = sand.u32 %s319, 1
        %s570 = scalar_lea.vmem [#allocation13], %s569
        // Predicated region
        $region65: #{tpu_custom_call.1} parent=51 // pred_check
          %p571 = pneg %p332
        $region66: #{tpu_custom_call.1} parent=51 // pred_check_branch
          %573 = sbr.rel (%p571) target = $region68
        $region67: #{tpu_custom_call.1} parent=51 // pred_region
          %575 = dma.done %s568, 16
        $region68: #{tpu_custom_call.1} parent=51 // pred_fallthru
          _
        %s576 = smul.u32 4, %s55
        %p577 = scmp.lt.s32.totalorder %s576, 3
        %s578 = scalar_select %p577, %s576, 3
        %s579 = smul.addr %s578, 8
        %s580 = scalar_lea.vmem %s3, %s579
        %p581 = pneg %p90
        %p582 = pneg %p87
        %s583 = smul.u32 4, %s55
        %p584 = scmp.lt.s32.totalorder %s583, 3
        %s585 = scalar_select %p584, %s583, 3
        %s586 = smul.addr %s585, 8
        %s587 = scalar_lea.vmem %s4, %s586
        %p588 = pneg %p116
        %p589 = pneg %p113
        %s590 = sand.u32 %s141, 1
        %s591 = scalar_lea.sflag [#allocation8], %s590
        %s592 = sand.u32 %s141, 1
        %s593 = smul.addr %s592, 256
        %s594 = scalar_lea.vmem [#allocation7], %s593
        %p595 = pneg %p154
        %p596 = pneg %p151
        %s597 = smul.u32 %s55, 3
        %s598 = sadd.s32 %s597, %s56
        %s599 = sadd.s32 %s598, %s57
        %s600 = sld [smem:[#allocation5 + %s599]]
        %s601 = sld [smem:[#allocation6 + %s599]]
        %s602 = smul.u32 2, %s601
        %p603 = scmp.lt.s32.totalorder %s600, 2
        %s604 = scalar_select %p603, %s600, 2
        %p605 = scmp.lt.s32.totalorder %s602, 1
        %s606 = scalar_select %p605, %s602, 1
        %s607 = smul.addr %s604, 2
        %s608 = sadd.s32 %s606, %s607
        %s609 = scalar_lea.vmem %s6, %s608
        %p610 = pneg %p192
        %p611 = pneg %p189
        %s612 = sand.u32 %s50, 1
        %s613 = scalar_lea.sflag [#allocation11], %s612
        %s614 = sand.u32 %s217, 1
        %s615 = smul.addr %s614, 256
        %s616 = scalar_lea.vmem [#allocation10], %s615
        %p617 = pneg %p230
        %p618 = pneg %p227
        %s619 = sand.u32 %s50, 1
        %s620 = scalar_lea.sflag [#allocation11], %s619
        %s621 = sand.u32 %s251, 1
        %s622 = scalar_lea.vmem [#allocation12], %s621
        %p623 = pneg %p264
        %p624 = pneg %p261
        %s625 = smul.u32 %s55, 3
        %s626 = sadd.s32 %s625, %s56
        %s627 = sadd.s32 %s626, %s57
        %s628 = sld [smem:[#allocation5 + %s627]]
        %p629 = scmp.lt.s32.totalorder %s628, 2
        %s630 = scalar_select %p629, %s628, 2
        %s631 = scalar_lea.vmem %s9, %s630
        %p632 = pneg %p298
        %p633 = pneg %p295
        %s634 = sand.u32 %s319, 1
        %s635 = scalar_lea.sflag [#allocation14], %s634
        %s636 = sand.u32 %s319, 1
        %s637 = scalar_lea.vmem [#allocation13], %s636
        %p638 = pneg %p332
        %p639 = pneg %p329
        %p640 = pneg %p358
        %p641 = pneg %p355
        %s642 = smul.u32 4, %s55
        %p643 = scmp.lt.s32.totalorder %s642, 3
        %s644 = scalar_select %p643, %s642, 3
        %s645 = smul.addr %s644, 8
        %s646 = scalar_lea.vmem %s3, %s645
        %s647 = smul.u32 4, %s55
        %s648 = smul.u32 4, %s55
        %p649 = scmp.lt.s32.totalorder %s648, 3
        %s650 = scalar_select %p649, %s648, 3
        %s651 = smul.addr %s650, 8
        %s652 = scalar_lea.vmem %s4, %s651
        %s653 = smul.u32 4, %s55
        %s654 = smul.u32 %s55, 3
        %s655 = sadd.s32 %s654, %s56
        %s656 = sadd.s32 %s655, %s57
        %s657 = sld [smem:[#allocation5 + %s656]]
        %s658 = sld [smem:[#allocation6 + %s656]]
        %s659 = smul.u32 2, %s658
        %s660 = smul.u32 %s55, 3
        %s661 = sadd.s32 %s660, %s56
        %s662 = sadd.s32 %s661, %s57
        %s663 = sld [smem:[#allocation5 + %s662]]
        %s664 = sld [smem:[#allocation6 + %s662]]
        %s665 = smul.u32 2, %s664
        %p666 = scmp.lt.s32.totalorder %s663, 2
        %s667 = scalar_select %p666, %s663, 2
        %p668 = scmp.lt.s32.totalorder %s665, 1
        %s669 = scalar_select %p668, %s665, 1
        %s670 = smul.addr %s667, 2
        %s671 = sadd.s32 %s669, %s670
        %s672 = scalar_lea.vmem %s6, %s671
        %s673 = smul.u32 %s55, 3
        %s674 = sadd.s32 %s673, %s56
        %s675 = sadd.s32 %s674, %s57
        %s676 = sld [smem:[#allocation5 + %s675]]
        %s677 = sld [smem:[#allocation6 + %s675]]
        %s678 = smul.u32 2, %s677
        %s679 = smul.u32 %s55, 3
        %s680 = sadd.s32 %s679, %s56
        %s681 = sadd.s32 %s680, %s57
        %s682 = sld [smem:[#allocation5 + %s681]]
        %s683 = sld [smem:[#allocation6 + %s681]]
        %s684 = smul.u32 32, %s683
        %s685 = smul.u32 %s55, 3
        %s686 = sadd.s32 %s685, %s56
        %s687 = sadd.s32 %s686, %s57
        %s688 = sld [smem:[#allocation5 + %s687]]
        %s689 = smul.u32 %s55, 3
        %s690 = sadd.s32 %s689, %s56
        %s691 = sadd.s32 %s690, %s57
        %s692 = sld [smem:[#allocation5 + %s691]]
        %p693 = scmp.lt.s32.totalorder %s692, 2
        %s694 = scalar_select %p693, %s692, 2
        %s695 = scalar_lea.vmem %s9, %s694
        %s696 = smul.u32 %s55, 3
        %s697 = sadd.s32 %s696, %s56
        %s698 = sadd.s32 %s697, %s57
        %s699 = sld [smem:[#allocation5 + %s698]]
        %s700 = smul.u32 %s55, 3
        %s701 = sadd.s32 %s700, %s56
        %s702 = sadd.s32 %s701, %s57
        %s703 = sld [smem:[#allocation5 + %s702]]
        %s704 = smul.u32 4, %s55
        %p705 = scmp.eq.s32.totalorder %s56, 0
        %p706 = scmp.eq.s32.totalorder %s57, 0
        %p707 = pnand %p705, %p706
        %p708 = pneg %p707
        // Predicated region
        $region69: #{tpu_custom_call.1} parent=51 // pred_check
          _
        $region70: #{tpu_custom_call.1} parent=51 // pred_check_branch
          %710 = sbr.rel (%p707) target = $region72
        $region71: #{tpu_custom_call.1} parent=51 // pred_region
          %711 = vst [vmem:[#allocation15] sm:$0xff] 0.0
          %712 = vst [vmem:[#allocation15 + $0x8] sm:$0xff] 0.0
          %713 = vst [vmem:[#allocation15 + $0x10] sm:$0xff] 0.0
          %714 = vst [vmem:[#allocation15 + $0x18] sm:$0xff] 0.0
        $region72: #{tpu_custom_call.1} parent=51 // pred_fallthru
          _
        %s715 = smul.u32 %s55, 3
        %s716 = sadd.s32 %s715, %s56
        %s717 = sld [smem:[#allocation4 + %s716]]
        %p718 = scmp.gt.s32.totalorder %s717, 0
        %p719 = pnand %p718, %p706
        %p720 = pneg %p719
        // Predicated region
        $region73: #{tpu_custom_call.1} parent=51 // pred_check
          _
        $region74: #{tpu_custom_call.1} parent=51 // pred_check_branch
          %722 = sbr.rel (%p719) target = $region76
        $region75: #{tpu_custom_call.1} parent=51 // pred_region
          %723 = vst [vmem:[#allocation2] sm:$0xff] 0.0
          %724 = vst [vmem:[#allocation2 + $0x8] sm:$0xff] 0.0
          %725 = vst [vmem:[#allocation2 + $0x10] sm:$0xff] 0.0
          %726 = vst [vmem:[#allocation2 + $0x18] sm:$0xff] 0.0
        $region76: #{tpu_custom_call.1} parent=51 // pred_fallthru
          _
        // Predicated region
        $region77: #{tpu_custom_call.1} parent=51 // pred_check
          %p727 = pneg %p718
        $region78: #{tpu_custom_call.1} parent=51 // pred_check_branch
          %729 = sbr.rel (%p727) target = $region80
        $region79: #{tpu_custom_call.1} parent=51 // pred_region
          %v730 = vld [vmem:[%s646] sm:$0xff]
          %v731 = vld [vmem:[%s646 + $0x8] sm:$0xff]
          %v732 = vld [vmem:[%s646 + $0x10] sm:$0xff]
          %v733 = vld [vmem:[%s646 + $0x18] sm:$0xff]
          %v734 = vld [vmem:[%s542] sm:$0xff]
          %v735 = vld [vmem:[%s542 + $0x8] sm:$0xff]
          %v736 = vld [vmem:[%s542 + $0x10] sm:$0xff]
          %v737 = vld [vmem:[%s542 + $0x18] sm:$0xff]
          %v738 = vld [vmem:[%s542 + $0x20] sm:$0xff]
          %v739 = vld [vmem:[%s542 + $0x28] sm:$0xff]
          %v740 = vld [vmem:[%s542 + $0x30] sm:$0xff]
          %v741 = vld [vmem:[%s542 + $0x38] sm:$0xff]
          %v742 = vld [vmem:[%s542 + $0x40] sm:$0xff]
          %v743 = vld [vmem:[%s542 + $0x48] sm:$0xff]
          %v744 = vld [vmem:[%s542 + $0x50] sm:$0xff]
          %v745 = vld [vmem:[%s542 + $0x58] sm:$0xff]
          %v746 = vld [vmem:[%s542 + $0x60] sm:$0xff]
          %v747 = vld [vmem:[%s542 + $0x68] sm:$0xff]
          %v748 = vld [vmem:[%s542 + $0x70] sm:$0xff]
          %v749 = vld [vmem:[%s542 + $0x78] sm:$0xff]
          %v750 = vld [vmem:[%s542 + $0x80] sm:$0xff]
          %v751 = vld [vmem:[%s542 + $0x88] sm:$0xff]
          %v752 = vld [vmem:[%s542 + $0x90] sm:$0xff]
          %v753 = vld [vmem:[%s542 + $0x98] sm:$0xff]
          %v754 = vld [vmem:[%s542 + $0xa0] sm:$0xff]
          %v755 = vld [vmem:[%s542 + $0xa8] sm:$0xff]
          %v756 = vld [vmem:[%s542 + $0xb0] sm:$0xff]
          %v757 = vld [vmem:[%s542 + $0xb8] sm:$0xff]
          %v758 = vld [vmem:[%s542 + $0xc0] sm:$0xff]
          %v759 = vld [vmem:[%s542 + $0xc8] sm:$0xff]
          %v760 = vld [vmem:[%s542 + $0xd0] sm:$0xff]
          %v761 = vld [vmem:[%s542 + $0xd8] sm:$0xff]
          %v762 = vld [vmem:[%s542 + $0xe0] sm:$0xff]
          %v763 = vld [vmem:[%s542 + $0xe8] sm:$0xff]
          %v764 = vld [vmem:[%s542 + $0xf0] sm:$0xff]
          %v765 = vld [vmem:[%s542 + $0xf8] sm:$0xff]
          %v766 = vld [vmem:[%s672] sm:$0x3]
          %v768 = vperm.slane %v766, 0
          %v769 = vperm.slane %v766, 1
          %772 = vmatpush.msra.mxu0 %v764
          %773 = vmatpush.msra.mxu0 %v762
          %774 = vmatpush.msra.mxu0 %v760
          %775 = vmatpush.msra.mxu0 %v758
          %776 = vmatpush.msra.mxu0 %v756
          %777 = vmatpush.msra.mxu0 %v754
          %778 = vmatpush.msra.mxu0 %v752
          %779 = vmatpush.msra.mxu0 %v750
          %780 = vmatpush.msra.mxu0 %v748
          %781 = vmatpush.msra.mxu0 %v746
          %782 = vmatpush.msra.mxu0 %v744
          %783 = vmatpush.msra.mxu0 %v742
          %784 = vmatpush.msra.mxu0 %v740
          %785 = vmatpush.msra.mxu0 %v738
          %786 = vmatpush.msra.mxu0 %v736
          %787 = vmatpush.msra.mxu0 %v734
          %788 = vmatmul.f32.gmra.mxu0 %v730
          %v789 = vpop.f32.mrf.mxu0
          %v790 = vadd.f32 %v768, %v789
          %791 = vmatmul.f32.gmra.mxu0 %v731
          %v792 = vpop.f32.mrf.mxu0
          %v793 = vadd.f32 %v768, %v792
          %794 = vmatmul.f32.gmra.mxu0 %v732
          %v795 = vpop.f32.mrf.mxu0
          %v796 = vadd.f32 %v768, %v795
          %797 = vmatmul.f32.gmra.mxu0 %v733
          %v798 = vpop.f32.mrf.mxu0
          %v799 = vadd.f32 %v768, %v798
          %800 = vdwg.mxu0
          %801 = vmatpush.msra.mxu0 %v765
          %802 = vmatpush.msra.mxu0 %v763
          %803 = vmatpush.msra.mxu0 %v761
          %804 = vmatpush.msra.mxu0 %v759
          %805 = vmatpush.msra.mxu0 %v757
          %806 = vmatpush.msra.mxu0 %v755
          %807 = vmatpush.msra.mxu0 %v753
          %808 = vmatpush.msra.mxu0 %v751
          %809 = vmatpush.msra.mxu0 %v749
          %810 = vmatpush.msra.mxu0 %v747
          %811 = vmatpush.msra.mxu0 %v745
          %812 = vmatpush.msra.mxu0 %v743
          %813 = vmatpush.msra.mxu0 %v741
          %814 = vmatpush.msra.mxu0 %v739
          %815 = vmatpush.msra.mxu0 %v737
          %816 = vmatpush.msra.mxu0 %v735
          %817 = vmatmul.f32.gmra.mxu0 %v730
          %v818 = vpop.f32.mrf.mxu0
          %v819 = vadd.f32 %v769, %v818
          %820 = vmatmul.f32.gmra.mxu0 %v731
          %v821 = vpop.f32.mrf.mxu0
          %v822 = vadd.f32 %v769, %v821
          %823 = vmatmul.f32.gmra.mxu0 %v732
          %v824 = vpop.f32.mrf.mxu0
          %v825 = vadd.f32 %v769, %v824
          %826 = vmatmul.f32.gmra.mxu0 %v733
          %v827 = vpop.f32.mrf.mxu0
          %v828 = vadd.f32 %v769, %v827
          %829 = vdwg.mxu0
          %v830 = vmax.f32 %v790, 0.0
          %v831 = vmax.f32 %v819, 0.0
          %v832 = vmax.f32 %v793, 0.0
          %v833 = vmax.f32 %v822, 0.0
          %v834 = vmax.f32 %v796, 0.0
          %v835 = vmax.f32 %v825, 0.0
          %v836 = vmax.f32 %v799, 0.0
          %v837 = vmax.f32 %v828, 0.0
          %v838 = vld [vmem:[#allocation2] sm:$0xff]
          %v839 = vld [vmem:[#allocation2 + $0x8] sm:$0xff]
          %v840 = vld [vmem:[#allocation2 + $0x10] sm:$0xff]
          %v841 = vld [vmem:[#allocation2 + $0x18] sm:$0xff]
          %v842 = vld [vmem:[%s552] sm:$0xff]
          %v843 = vld [vmem:[%s552 + $0x8] sm:$0xff]
          %v844 = vld [vmem:[%s552 + $0x10] sm:$0xff]
          %v845 = vld [vmem:[%s552 + $0x18] sm:$0xff]
          %v846 = vld [vmem:[%s552 + $0x20] sm:$0xff]
          %v847 = vld [vmem:[%s552 + $0x28] sm:$0xff]
          %v848 = vld [vmem:[%s552 + $0x30] sm:$0xff]
          %v849 = vld [vmem:[%s552 + $0x38] sm:$0xff]
          %v850 = vld [vmem:[%s552 + $0x40] sm:$0xff]
          %v851 = vld [vmem:[%s552 + $0x48] sm:$0xff]
          %v852 = vld [vmem:[%s552 + $0x50] sm:$0xff]
          %v853 = vld [vmem:[%s552 + $0x58] sm:$0xff]
          %v854 = vld [vmem:[%s552 + $0x60] sm:$0xff]
          %v855 = vld [vmem:[%s552 + $0x68] sm:$0xff]
          %v856 = vld [vmem:[%s552 + $0x70] sm:$0xff]
          %v857 = vld [vmem:[%s552 + $0x78] sm:$0xff]
          %v858 = vld [vmem:[%s552 + $0x80] sm:$0xff]
          %v859 = vld [vmem:[%s552 + $0x88] sm:$0xff]
          %v860 = vld [vmem:[%s552 + $0x90] sm:$0xff]
          %v861 = vld [vmem:[%s552 + $0x98] sm:$0xff]
          %v862 = vld [vmem:[%s552 + $0xa0] sm:$0xff]
          %v863 = vld [vmem:[%s552 + $0xa8] sm:$0xff]
          %v864 = vld [vmem:[%s552 + $0xb0] sm:$0xff]
          %v865 = vld [vmem:[%s552 + $0xb8] sm:$0xff]
          %v866 = vld [vmem:[%s552 + $0xc0] sm:$0xff]
          %v867 = vld [vmem:[%s552 + $0xc8] sm:$0xff]
          %v868 = vld [vmem:[%s552 + $0xd0] sm:$0xff]
          %v869 = vld [vmem:[%s552 + $0xd8] sm:$0xff]
          %v870 = vld [vmem:[%s552 + $0xe0] sm:$0xff]
          %v871 = vld [vmem:[%s552 + $0xe8] sm:$0xff]
          %v872 = vld [vmem:[%s552 + $0xf0] sm:$0xff]
          %v873 = vld [vmem:[%s552 + $0xf8] sm:$0xff]
          %874 = vmatpush.msra.mxu0 %v857
          %875 = vmatpush.msra.mxu0 %v856
          %876 = vmatpush.msra.mxu0 %v855
          %877 = vmatpush.msra.mxu0 %v854
          %878 = vmatpush.msra.mxu0 %v853
          %879 = vmatpush.msra.mxu0 %v852
          %880 = vmatpush.msra.mxu0 %v851
          %881 = vmatpush.msra.mxu0 %v850
          %882 = vmatpush.msra.mxu0 %v849
          %883 = vmatpush.msra.mxu0 %v848
          %884 = vmatpush.msra.mxu0 %v847
          %885 = vmatpush.msra.mxu0 %v846
          %886 = vmatpush.msra.mxu0 %v845
          %887 = vmatpush.msra.mxu0 %v844
          %888 = vmatpush.msra.mxu0 %v843
          %889 = vmatpush.msra.mxu0 %v842
          %890 = vmatmul.f32.gmra.mxu0 %v830
          %v891 = vpop.f32.mrf.mxu0
          %v892 = vadd.f32 0.0, %v891
          %893 = vmatmul.f32.gmra.mxu0 %v832
          %v894 = vpop.f32.mrf.mxu0
          %v895 = vadd.f32 0.0, %v894
          %896 = vmatmul.f32.gmra.mxu0 %v834
          %v897 = vpop.f32.mrf.mxu0
          %v898 = vadd.f32 0.0, %v897
          %899 = vmatmul.f32.gmra.mxu0 %v836
          %v900 = vpop.f32.mrf.mxu0
          %v901 = vadd.f32 0.0, %v900
          %902 = vdwg.mxu0
          %903 = vmatpush.msra.mxu0 %v873
          %904 = vmatpush.msra.mxu0 %v872
          %905 = vmatpush.msra.mxu0 %v871
          %906 = vmatpush.msra.mxu0 %v870
          %907 = vmatpush.msra.mxu0 %v869
          %908 = vmatpush.msra.mxu0 %v868
          %909 = vmatpush.msra.mxu0 %v867
          %910 = vmatpush.msra.mxu0 %v866
          %911 = vmatpush.msra.mxu0 %v865
          %912 = vmatpush.msra.mxu0 %v864
          %913 = vmatpush.msra.mxu0 %v863
          %914 = vmatpush.msra.mxu0 %v862
          %915 = vmatpush.msra.mxu0 %v861
          %916 = vmatpush.msra.mxu0 %v860
          %917 = vmatpush.msra.mxu0 %v859
          %918 = vmatpush.msra.mxu0 %v858
          %919 = vmatmul.f32.gmra.mxu0 %v831
          %v920 = vpop.f32.mrf.mxu0
          %v921 = vadd.f32 %v892, %v920
          %922 = vmatmul.f32.gmra.mxu0 %v833
          %v923 = vpop.f32.mrf.mxu0
          %v924 = vadd.f32 %v895, %v923
          %925 = vmatmul.f32.gmra.mxu0 %v835
          %v926 = vpop.f32.mrf.mxu0
          %v927 = vadd.f32 %v898, %v926
          %928 = vmatmul.f32.gmra.mxu0 %v837
          %v929 = vpop.f32.mrf.mxu0
          %v930 = vadd.f32 %v901, %v929
          %931 = vdwg.mxu0
          %v932 = vadd.f32 %v838, %v921
          %v933 = vadd.f32 %v839, %v924
          %v934 = vadd.f32 %v840, %v927
          %v935 = vadd.f32 %v841, %v930
          %936 = vst [vmem:[#allocation2] sm:$0xff] %v932
          %937 = vst [vmem:[#allocation2 + $0x8] sm:$0xff] %v933
          %938 = vst [vmem:[#allocation2 + $0x10] sm:$0xff] %v934
          %939 = vst [vmem:[#allocation2 + $0x18] sm:$0xff] %v935
        $region80: #{tpu_custom_call.1} parent=51 // pred_fallthru
          _
        // Predicated region
        $region81: #{tpu_custom_call.1} parent=51 // pred_check
          _
        $region82: #{tpu_custom_call.1} parent=51 // pred_check_branch
          %941 = sbr.rel (%p719) target = $region84
        $region83: #{tpu_custom_call.1} parent=51 // pred_region
          %v942 = vld [vmem:[%s646] sm:$0xff]
          %v943 = vld [vmem:[%s646 + $0x8] sm:$0xff]
          %v944 = vld [vmem:[%s646 + $0x10] sm:$0xff]
          %v945 = vld [vmem:[%s646 + $0x18] sm:$0xff]
          %v946 = vld [vmem:[#allocation2] sm:$0xff]
          %v947 = vld [vmem:[#allocation2 + $0x8] sm:$0xff]
          %v948 = vld [vmem:[#allocation2 + $0x10] sm:$0xff]
          %v949 = vld [vmem:[#allocation2 + $0x18] sm:$0xff]
          %v950 = vld [vmem:[%s561] sm:$0x1]
          %v952 = vperm.slane %v950, 0
          %v954 = vadd.f32 %v946, %v952
          %v955 = vadd.f32 %v947, %v952
          %v956 = vadd.f32 %v948, %v952
          %v957 = vadd.f32 %v949, %v952
          %v958 = vadd.f32 %v954, %v942
          %v959 = vadd.f32 %v955, %v943
          %v960 = vadd.f32 %v956, %v944
          %v961 = vadd.f32 %v957, %v945
          %962 = vadd.xlane.f32.xlu0 %v958
          %v963 = vpop.xlane.xlu0 %962
          %964 = vadd.xlane.f32.xlu0 %v959
          %v965 = vpop.xlane.xlu0 %964
          %966 = vadd.xlane.f32.xlu0 %v960
          %v967 = vpop.xlane.xlu0 %966
          %968 = vadd.xlane.f32.xlu0 %v961
          %v969 = vpop.xlane.xlu0 %968
          %v970 = vmul.f32 %v963, 0.0078125
          %v971 = vmul.f32 %v965, 0.0078125
          %v972 = vmul.f32 %v967, 0.0078125
          %v973 = vmul.f32 %v969, 0.0078125
          %v974 = vmul.f32 %v958, %v958
          %v975 = vmul.f32 %v959, %v959
          %v976 = vmul.f32 %v960, %v960
          %v977 = vmul.f32 %v961, %v961
          %978 = vadd.xlane.f32.xlu0 %v974
          %v979 = vpop.xlane.xlu0 %978
          %980 = vadd.xlane.f32.xlu0 %v975
          %v981 = vpop.xlane.xlu0 %980
          %982 = vadd.xlane.f32.xlu0 %v976
          %v983 = vpop.xlane.xlu0 %982
          %984 = vadd.xlane.f32.xlu0 %v977
          %v985 = vpop.xlane.xlu0 %984
          %v986 = vmul.f32 %v979, 0.0078125
          %v987 = vmul.f32 %v981, 0.0078125
          %v988 = vmul.f32 %v983, 0.0078125
          %v989 = vmul.f32 %v985, 0.0078125
          %v990 = vmul.f32 %v970, %v970
          %v991 = vmul.f32 %v971, %v971
          %v992 = vmul.f32 %v972, %v972
          %v993 = vmul.f32 %v973, %v973
          %v994 = vsub.f32 %v986, %v990
          %v995 = vsub.f32 %v987, %v991
          %v996 = vsub.f32 %v988, %v992
          %v997 = vsub.f32 %v989, %v993
          %v998 = vmax.f32 %v994, 0.0
          %v999 = vmax.f32 %v995, 0.0
          %v1000 = vmax.f32 %v996, 0.0
          %v1001 = vmax.f32 %v997, 0.0
          %v1002 = vsub.f32 %v958, %v970
          %v1003 = vsub.f32 %v959, %v971
          %v1004 = vsub.f32 %v960, %v972
          %v1005 = vsub.f32 %v961, %v973
          %v1006 = vadd.f32 %v998, 1e-05
          %v1007 = vadd.f32 %v999, 1e-05
          %v1008 = vadd.f32 %v1000, 1e-05
          %v1009 = vadd.f32 %v1001, 1e-05
          %v1010 = vrsqrt.pop %v1006
          %v1011 = vmul.f32 %v1010, %v1006
          %v1012 = vmul.f32 %v1011, %v1010
          %v1013 = vmul.f32 0.5, %v1012
          %v1014 = vsub.f32 1.5, %v1013
          %v1015 = vmul.f32 %v1010, %v1014
          %vm1016 = vweird.f32 %v1006
          %vm1017 = vweird.f32 %v1010
          %vm1018 = vmor %vm1016, %vm1017
          %v1019 = vsel %vm1018, %v1010, %v1015
          %v1020 = vrsqrt.pop %v1007
          %v1021 = vmul.f32 %v1020, %v1007
          %v1022 = vmul.f32 %v1021, %v1020
          %v1023 = vmul.f32 0.5, %v1022
          %v1024 = vsub.f32 1.5, %v1023
          %v1025 = vmul.f32 %v1020, %v1024
          %vm1026 = vweird.f32 %v1007
          %vm1027 = vweird.f32 %v1020
          %vm1028 = vmor %vm1026, %vm1027
          %v1029 = vsel %vm1028, %v1020, %v1025
          %v1030 = vrsqrt.pop %v1008
          %v1031 = vmul.f32 %v1030, %v1008
          %v1032 = vmul.f32 %v1031, %v1030
          %v1033 = vmul.f32 0.5, %v1032
          %v1034 = vsub.f32 1.5, %v1033
          %v1035 = vmul.f32 %v1030, %v1034
          %vm1036 = vweird.f32 %v1008
          %vm1037 = vweird.f32 %v1030
          %vm1038 = vmor %vm1036, %vm1037
          %v1039 = vsel %vm1038, %v1030, %v1035
          %v1040 = vrsqrt.pop %v1009
          %v1041 = vmul.f32 %v1040, %v1009
          %v1042 = vmul.f32 %v1041, %v1040
          %v1043 = vmul.f32 0.5, %v1042
          %v1044 = vsub.f32 1.5, %v1043
          %v1045 = vmul.f32 %v1040, %v1044
          %vm1046 = vweird.f32 %v1009
          %vm1047 = vweird.f32 %v1040
          %vm1048 = vmor %vm1046, %vm1047
          %v1049 = vsel %vm1048, %v1040, %v1045
          %v1050 = vmul.f32 %v1002, %v1019
          %v1051 = vmul.f32 %v1003, %v1029
          %v1052 = vmul.f32 %v1004, %v1039
          %v1053 = vmul.f32 %v1005, %v1049
          %v1054 = vld [vmem:[%s695] sm:$0x1]
          %v1056 = vperm.slane %v1054, 0
          %v1058 = vmul.f32 %v1050, %v1056
          %v1059 = vmul.f32 %v1051, %v1056
          %v1060 = vmul.f32 %v1052, %v1056
          %v1061 = vmul.f32 %v1053, %v1056
          %v1062 = vld [vmem:[%s570] sm:$0x1]
          %v1064 = vperm.slane %v1062, 0
          %v1066 = vadd.f32 %v1058, %v1064
          %v1067 = vadd.f32 %v1059, %v1064
          %v1068 = vadd.f32 %v1060, %v1064
          %v1069 = vadd.f32 %v1061, %v1064
          %v1070 = vld [vmem:[%s652] sm:$0xff]
          %v1071 = vld [vmem:[%s652 + $0x8] sm:$0xff]
          %v1072 = vld [vmem:[%s652 + $0x10] sm:$0xff]
          %v1073 = vld [vmem:[%s652 + $0x18] sm:$0xff]
          %s1074 = sadd.s32 %s56, 1
          %v1075 = vstv %s1074
          %vm1076 = vcmp.eq.s32.totalorder %v1070, %v1075
          %vm1077 = vcmp.eq.s32.totalorder %v1071, %v1075
          %vm1078 = vcmp.eq.s32.totalorder %v1072, %v1075
          %vm1079 = vcmp.eq.s32.totalorder %v1073, %v1075
          %v1080 = vld [vmem:[#allocation15] sm:$0xff]
          %v1081 = vld [vmem:[#allocation15 + $0x8] sm:$0xff]
          %v1082 = vld [vmem:[#allocation15 + $0x10] sm:$0xff]
          %v1083 = vld [vmem:[#allocation15 + $0x18] sm:$0xff]
          %v1084 = vsel %vm1076, 1, 0
          %v1085 = vsel %vm1077, 1, 0
          %v1086 = vsel %vm1078, 1, 0
          %v1087 = vsel %vm1079, 1, 0
          %1088 = vset.pattern.permute.xlu0 0
          %1089 = vperm.xlu0 %1088, %v1084
          %v1090 = vpop.permute.xlu0 %1089
          %1091 = vset.pattern.permute.xlu0 0
          %1092 = vperm.xlu0 %1091, %v1085
          %v1093 = vpop.permute.xlu0 %1092
          %1094 = vset.pattern.permute.xlu0 0
          %1095 = vperm.xlu0 %1094, %v1086
          %v1096 = vpop.permute.xlu0 %1095
          %1097 = vset.pattern.permute.xlu0 0
          %1098 = vperm.xlu0 %1097, %v1087
          %v1099 = vpop.permute.xlu0 %1098
          %vm1100 = vcmp.eq.s32.totalorder %v1090, 1
          %vm1101 = vcmp.eq.s32.totalorder %v1093, 1
          %vm1102 = vcmp.eq.s32.totalorder %v1096, 1
          %vm1103 = vcmp.eq.s32.totalorder %v1099, 1
          %v1104 = vsel %vm1100, %v1066, %v1080
          %v1105 = vsel %vm1101, %v1067, %v1081
          %v1106 = vsel %vm1102, %v1068, %v1082
          %v1107 = vsel %vm1103, %v1069, %v1083
          %1108 = vst [vmem:[#allocation15] sm:$0xff] %v1104
          %1109 = vst [vmem:[#allocation15 + $0x8] sm:$0xff] %v1105
          %1110 = vst [vmem:[#allocation15 + $0x10] sm:$0xff] %v1106
          %1111 = vst [vmem:[#allocation15 + $0x18] sm:$0xff] %v1107
        $region84: #{tpu_custom_call.1} parent=51 // pred_fallthru
          _
        // Predicated region
        $region85: #{tpu_custom_call.1} parent=51 // pred_check
          %p1112 = pneg %p355
        $region86: #{tpu_custom_call.1} parent=51 // pred_check_branch
          %1114 = sbr.rel (%p1112) target = $region88
        $region87: #{tpu_custom_call.1} parent=51 // pred_region
          %s1115 = smul.u32 4, %s55
          %1117 = vsyncadd [#allocation9], 0
          %s1118 = smul.addr %s1115, 8
          %s1119 = scalar_lea.hbm %s11, %s1118
          %s1120 = sshll.u32 [#allocation15], 4
          %s1121 = int_to_ptr.vmem [resolvable:$true] %s1120
          %s1122 = sshll.u32 %s1119, 4
          %s1123 = int_to_ptr.hbm [resolvable:$true] %s1122
          %1128 = dma.vmem_to_hbm [thread:$0]  %s1121, 512, %s1123, [#allocation9], 128, 128, 8
        $region88: #{tpu_custom_call.1} parent=51 // pred_fallthru
          _
        // Predicated region
        $region89: #{tpu_custom_call.1} parent=51 // pred_check
          %p1129 = pneg %p355
        $region90: #{tpu_custom_call.1} parent=51 // pred_check_branch
          %1131 = sbr.rel (%p1129) target = $region92
        $region91: #{tpu_custom_call.1} parent=51 // pred_region
          %1133 = dma.done [#allocation9], 512
        $region92: #{tpu_custom_call.1} parent=51 // pred_fallthru
          _
      $region52: #{tpu_custom_call.1} parent=5 // pred_fallthru
        _
      %p1134 = scmp.le.s32.totalorder 2, %s45
      // Predicated region
      $region93: #{tpu_custom_call.1} parent=5 // pred_check
        %p1135 = pneg %p1134
      $region94: #{tpu_custom_call.1} parent=5 // pred_check_branch
        %1137 = sbr.rel (%p1135) target = $region96
      $region95: #{tpu_custom_call.1} parent=5 // pred_region
        %s1138 = ssub.s32 %s45, 2
      $region96: #{tpu_custom_call.1} parent=5 // pred_fallthru
        _
    $region6: #{tpu_custom_call.1} parent=1 // loop_footer
      %s49 = sadd.s32 1, %s45
    $region7: #{tpu_custom_call.1} parent=1 // loop_footer_branch
      %44 = sbr.rel target = $region3
    $region8: #{tpu_custom_call.1} parent=1 // loop_exit
      _
    %1139 = vsyncpa [#allocation8], 1
    %s1140 = scalar_lea.sflag [#allocation8], 1
    %1141 = vsyncpa %s1140, 1
    %1142 = vsyncpa [#allocation11], 1
    %s1143 = scalar_lea.sflag [#allocation11], 1
    %1144 = vsyncpa %s1143, 1
    %1145 = vsyncpa [#allocation14], 1
    %s1146 = scalar_lea.sflag [#allocation14], 1
    %1147 = vsyncpa %s1146, 1
    %1148 = vsyncpa [#allocation9], 1
    %s1149 = scalar_lea.sflag [#allocation9], 1
    %1150 = vsyncpa %s1149, 1

</llo_original>
